<compile_context>
chip_gen: v7x
topology: tpu7x:2x2x1
jax: 0.10.0
libtpu: 0.0.40
codegen_flags: <defaults>
</compile_context>

<pallas_src>
from functools import partial

import jax
import jax.numpy as jnp
from jax.experimental import pallas as pl
from jax.experimental.pallas import tpu as pltpu

VOCAB = 16   # vocab size (digits + specials)
EMB = 16     # embedding dim
HID = 32     # GRU hidden size
SOS = 1
PAD = 0


# ---------------------------------------------------------------------------
# Kernels (single invocation each; time loop unrolled inside the body)
# ---------------------------------------------------------------------------
def encoder_kernel(gi_ref, mask_ref, whh_ref, bhhn_ref, hfin_ref, *, seq_len):
    """GRU recurrence with packed-sequence masking; returns final hidden only.

    gi_ref   : [T, 3, B_pad, H]  precomputed x@W_ih^T (+ folded biases), per gate
    mask_ref : [T, B_pad, 1]     1.0 while t < length[b], else 0.0
    whh_ref  : [3, H, H]         per-gate W_hh^T
    bhhn_ref : [1, H]            b_hh for the n gate (r/z biases folded into gi)
    hfin_ref : [B_pad, H]        final hidden state
    """
    whh_r = whh_ref[0]
    whh_z = whh_ref[1]
    whh_n = whh_ref[2]
    bhh_n = bhhn_ref[...]

    h = jnp.zeros(hfin_ref.shape, jnp.float32)
    for t in range(seq_len):                         # fully unrolled (T small)
        gr = gi_ref[t, 0]
        gz = gi_ref[t, 1]
        gn = gi_ref[t, 2]
        r = jax.nn.sigmoid(gr + jnp.dot(h, whh_r, preferred_element_type=jnp.float32))
        z = jax.nn.sigmoid(gz + jnp.dot(h, whh_z, preferred_element_type=jnp.float32))
        n = jnp.tanh(gn + r * (jnp.dot(h, whh_n, preferred_element_type=jnp.float32) + bhh_n))
        h_new = (1.0 - z) * n + z * h
        m = mask_ref[t]                              # [B_pad, 1] lane-broadcast
        h = h + m * (h_new - h)                      # keep old h past length
    hfin_ref[...] = h


def decoder_kernel(gi_ref, h0_ref, whh_ref, bhhn_ref, wfc_ref, bfc_ref,
                   logp_ref, hfin_ref, *, seq_len, vocab):
    """GRU decoder (teacher forcing) + FC + log_softmax; lane-dense output.

    gi_ref   : [T, 3, B_pad, H]  precomputed x@W_ih^T (+ folded biases)
    h0_ref   : [B_pad, H]        encoder final hidden
    whh_ref  : [3, H, H]         per-gate W_hh^T
    bhhn_ref : [1, H]
    wfc_ref  : [H, V]            fc weight^T
    bfc_ref  : [1, V]
    logp_ref : [B_pad, T*V]      log-probs, lane-dense (T*V = 128)
    hfin_ref : [B_pad, H]        final hidden state
    """
    whh_r = whh_ref[0]
    whh_z = whh_ref[1]
    whh_n = whh_ref[2]
    bhh_n = bhhn_ref[...]
    wfc = wfc_ref[...]
    bfc = bfc_ref[...]

    h = h0_ref[...]
    for t in range(seq_len):                         # fully unrolled
        gr = gi_ref[t, 0]
        gz = gi_ref[t, 1]
        gn = gi_ref[t, 2]
        r = jax.nn.sigmoid(gr + jnp.dot(h, whh_r, preferred_element_type=jnp.float32))
        z = jax.nn.sigmoid(gz + jnp.dot(h, whh_z, preferred_element_type=jnp.float32))
        n = jnp.tanh(gn + r * (jnp.dot(h, whh_n, preferred_element_type=jnp.float32) + bhh_n))
        h = (1.0 - z) * n + z * h

        logits = jnp.dot(h, wfc, preferred_element_type=jnp.float32) + bfc   # [B_pad, V]
        mx = jnp.max(logits, axis=-1, keepdims=True)
        lse = mx + jnp.log(jnp.sum(jnp.exp(logits - mx), axis=-1, keepdims=True))
        logp_ref[:, t * vocab:(t + 1) * vocab] = logits - lse
    hfin_ref[...] = h


# ---------------------------------------------------------------------------
# pallas_call wrappers (no grid: single invocation, whole arrays in VMEM)
# ---------------------------------------------------------------------------
def run_encoder(gi, mask, whh, bhh_n):
    T, _, B_pad, H = gi.shape
    vmem = pl.BlockSpec(memory_space=pltpu.MemorySpace.VMEM)
    return pl.pallas_call(
        partial(encoder_kernel, seq_len=T),
        out_shape=jax.ShapeDtypeStruct((B_pad, H), jnp.float32),
        in_specs=[vmem, vmem, vmem, vmem],
        out_specs=vmem,
    )(gi, mask, whh, bhh_n)


def run_decoder(gi, h0, whh, bhh_n, wfc, bfc):
    T, _, B_pad, H = gi.shape
    V = wfc.shape[1]
    vmem = pl.BlockSpec(memory_space=pltpu.MemorySpace.VMEM)
    return pl.pallas_call(
        partial(decoder_kernel, seq_len=T, vocab=V),
        out_shape=(jax.ShapeDtypeStruct((B_pad, T * V), jnp.float32),
                   jax.ShapeDtypeStruct((B_pad, H), jnp.float32)),
        in_specs=[vmem] * 6,
        out_specs=(vmem, vmem),
    )(gi, h0, whh, bhh_n, wfc, bfc)


# ---------------------------------------------------------------------------
# Parameter prep / XLA glue (embeddings, batched input-gate precompute)
# ---------------------------------------------------------------------------
_HIGH = jax.lax.Precision.HIGHEST


def _split_gates_ih(w_ih, b_ih, b_hh, hid):
    """w_ih:[3H,E] -> [3,E,H]; bias:[3,H] with b_hh folded for r/z gates."""
    w = w_ih.reshape(3, hid, -1).transpose(0, 2, 1)
    bih = b_ih.reshape(3, hid)
    bhh = b_hh.reshape(3, hid)
    bias = jnp.stack([bih[0] + bhh[0], bih[1] + bhh[1], bih[2]], axis=0)
    return w, bias


def _split_gates_hh(w_hh, b_hh, hid):
    """w_hh:[3H,H] -> per-gate W_hh^T [3,H,H]; b_hh of the n gate as [1,H]."""
    w = w_hh.reshape(3, hid, hid).transpose(0, 2, 1)
    bhh_n = b_hh.reshape(3, hid)[2].reshape(1, hid)
    return w, bhh_n


def _input_gates(x_tm, w_gates, bias_gates):
    """Batched input-side matmul for all timesteps: [T,B,E]->[T,3,B,H]."""
    gi = jnp.einsum("tbe,geh->tgbh", x_tm, w_gates, precision=_HIGH)
    return gi + bias_gates[None, :, None, :]


def init_params(key):
    ks = jax.random.split(key, 12)
    s = 0.1
    return {
        "enc_emb": s * jax.random.normal(ks[0], (VOCAB, EMB), jnp.float32),
        "enc_wih": s * jax.random.normal(ks[1], (3 * HID, EMB), jnp.float32),
        "enc_whh": s * jax.random.normal(ks[2], (3 * HID, HID), jnp.float32),
        "enc_bih": s * jax.random.normal(ks[3], (3 * HID,), jnp.float32),
        "enc_bhh": s * jax.random.normal(ks[4], (3 * HID,), jnp.float32),
        "dec_emb": s * jax.random.normal(ks[5], (VOCAB, EMB), jnp.float32),
        "dec_wih": s * jax.random.normal(ks[6], (3 * HID, EMB), jnp.float32),
        "dec_whh": s * jax.random.normal(ks[7], (3 * HID, HID), jnp.float32),
        "dec_bih": s * jax.random.normal(ks[8], (3 * HID,), jnp.float32),
        "dec_bhh": s * jax.random.normal(ks[9], (3 * HID,), jnp.float32),
        "fc_w": s * jax.random.normal(ks[10], (VOCAB, HID), jnp.float32),
        "fc_b": s * jax.random.normal(ks[11], (VOCAB,), jnp.float32),
    }


def seq2seq_forward(params, input_ids, target_ids, input_length):
    B, T_in = input_ids.shape
    _, T_out = target_ids.shape
    B_pad = ((B + 7) // 8) * 8            # pad batch to full f32 sublane count
    pad_b = B_pad - B

    # ----- encoder -----
    enc_emb = jnp.take(params["enc_emb"], input_ids, axis=0)            # [B,T,E]
    x_tm = jnp.pad(jnp.transpose(enc_emb, (1, 0, 2)),
                   ((0, 0), (0, pad_b), (0, 0)))                        # [T,B_pad,E]
    wih_g, bih_g = _split_gates_ih(params["enc_wih"], params["enc_bih"],
                                   params["enc_bhh"], HID)
    whh_g, bhhn = _split_gates_hh(params["enc_whh"], params["enc_bhh"], HID)
    gi_enc = _input_gates(x_tm, wih_g, bih_g)                           # [T,3,B_pad,H]

    lengths = jnp.pad(input_length.astype(jnp.int32), (0, pad_b))       # pad rows len=0
    tgrid = jnp.arange(T_in, dtype=jnp.int32)[:, None]
    mask = (tgrid < lengths[None, :]).astype(jnp.float32)[:, :, None]   # [T,B_pad,1]

    h_enc = run_encoder(gi_enc, mask, whh_g, bhhn)                      # [B_pad,H]

    # ----- decoder (teacher forcing: SOS + target[:, :-1]) -----
    dec_in = jnp.concatenate(
        [jnp.full((B, 1), SOS, jnp.int32), target_ids[:, :-1]], axis=1)
    dec_emb = jnp.take(params["dec_emb"], dec_in, axis=0)               # [B,T_out,E]
    d_tm = jnp.pad(jnp.transpose(dec_emb, (1, 0, 2)),
                   ((0, 0), (0, pad_b), (0, 0)))                        # [T_out,B_pad,E]
    dwih_g, dbih_g = _split_gates_ih(params["dec_wih"], params["dec_bih"],
                                     params["dec_bhh"], HID)
    dwhh_g, dbhhn = _split_gates_hh(params["dec_whh"], params["dec_bhh"], HID)
    gi_dec = _input_gates(d_tm, dwih_g, dbih_g)                         # [T_out,3,B_pad,H]

    wfc = params["fc_w"].T                                              # [H,V]
    bfc = params["fc_b"].reshape(1, -1)                                 # [1,V]

    logp_flat, h_dec = run_decoder(gi_dec, h_enc, dwhh_g, dbhhn, wfc, bfc)

    decoder_outputs = logp_flat[:B].reshape(B, T_out, VOCAB)            # [B,T_out,V]
    decoder_hidden = h_dec[:B][None]                                    # [1,B,H]
    return decoder_outputs, decoder_hidden


# TODO(synk): Seq2Seq.predict / NumDecoder.forward_eval (greedy decoding) is not
# implemented; only the teacher-forced training forward is translated.


# ---------------------------------------------------------------------------
# Pure-JAX reference (for correctness check)
# ---------------------------------------------------------------------------
def _ref_forward(params, input_ids, target_ids, input_length):
    B, T_in = input_ids.shape
    _, T_out = target_ids.shape

    def dot(a, b):
        return jnp.dot(a, b, precision=_HIGH)

    def gru_cell(x, h, wih, whh, bih, bhh):
        gi = dot(x, wih.T) + bih
        gh = dot(h, whh.T) + bhh
        ir, iz, inn = jnp.split(gi, 3, axis=-1)
        hr, hz, hn = jnp.split(gh, 3, axis=-1)
        r = jax.nn.sigmoid(ir + hr)
        z = jax.nn.sigmoid(iz + hz)
        n = jnp.tanh(inn + r * hn)
        return (1.0 - z) * n + z * h

    h = jnp.zeros((B, HID), jnp.float32)
    x = jnp.take(params["enc_emb"], input_ids, axis=0)
    for t in range(T_in):
        hn = gru_cell(x[:, t], h, params["enc_wih"], params["enc_whh"],
                      params["enc_bih"], params["enc_bhh"])
        h = jnp.where((input_length > t)[:, None], hn, h)

    dec_in = jnp.concatenate(
        [jnp.full((B, 1), SOS, jnp.int32), target_ids[:, :-1]], axis=1)
    xd = jnp.take(params["dec_emb"], dec_in, axis=0)
    outs = []
    for t in range(T_out):
        h = gru_cell(xd[:, t], h, params["dec_wih"], params["dec_whh"],
                     params["dec_bih"], params["dec_bhh"])
        logits = dot(h, params["fc_w"].T) + params["fc_b"]
        outs.append(jax.nn.log_softmax(logits, axis=-1))
    return jnp.stack(outs, axis=1), h[None]


if __name__ == "__main__":
    key = jax.random.PRNGKey(0)
    pkey, ikey, tkey = jax.random.split(key, 3)
    params = init_params(pkey)

    B, T_in, T_out = 2, 8, 8
    input_ids = jax.random.randint(ikey, (B, T_in), 2, VOCAB, dtype=jnp.int32)
    target_ids = jax.random.randint(tkey, (B, T_out), 2, VOCAB, dtype=jnp.int32)
    input_length = jnp.array([8, 5], dtype=jnp.int32)

    dec_out, dec_hidden = seq2seq_forward(params, input_ids, target_ids, input_length)
    jax.block_until_ready((dec_out, dec_hidden))

    assert dec_out.shape == (B, T_out, VOCAB)
    assert dec_hidden.shape == (1, B, HID)

    ref_out, ref_hidden = _ref_forward(params, input_ids, target_ids, input_length)
    assert jnp.allclose(dec_out, ref_out, atol=1e-3, rtol=1e-3)
    assert jnp.allclose(dec_hidden, ref_hidden, atol=1e-3, rtol=1e-3)
    # log-softmax rows must normalize
    assert jnp.allclose(jnp.exp(dec_out).sum(-1), 1.0, atol=1e-4)

    print("KERNEL_OK")
</pallas_src>

<mosaic_0001>
module attributes {stable_mosaic.version = 11 : i64} {
  func.func @encoder_kernel(%arg0: memref<8x3x8x32xf32, #tpu.memory_space<vmem>>, %arg1: memref<8x8x1xf32, #tpu.memory_space<vmem>>, %arg2: memref<3x32x32xf32, #tpu.memory_space<vmem>>, %arg3: memref<1x32xf32, #tpu.memory_space<vmem>>, %arg4: memref<8x32xf32, #tpu.memory_space<vmem>>) attributes {dimension_semantics = [], scalar_prefetch = 0 : i64, scratch_operands = 0 : i64, tpu.core_type = #tpu.core_type<tc>} {
    %c0 = arith.constant 0 : index
    %c0_0 = arith.constant 0 : index
    %c0_1 = arith.constant 0 : index
    %0 = vector.load %arg2[%c0, %c0_0, %c0_1] : memref<3x32x32xf32, #tpu.memory_space<vmem>>, vector<1x32x32xf32>
    %1 = vector.shape_cast %0 : vector<1x32x32xf32> to vector<32x32xf32>
    %c1 = arith.constant 1 : index
    %c0_2 = arith.constant 0 : index
    %c0_3 = arith.constant 0 : index
    %2 = vector.load %arg2[%c1, %c0_2, %c0_3] : memref<3x32x32xf32, #tpu.memory_space<vmem>>, vector<1x32x32xf32>
    %3 = vector.shape_cast %2 : vector<1x32x32xf32> to vector<32x32xf32>
    %c2 = arith.constant 2 : index
    %c0_4 = arith.constant 0 : index
    %c0_5 = arith.constant 0 : index
    %4 = vector.load %arg2[%c2, %c0_4, %c0_5] : memref<3x32x32xf32, #tpu.memory_space<vmem>>, vector<1x32x32xf32>
    %5 = vector.shape_cast %4 : vector<1x32x32xf32> to vector<32x32xf32>
    %c0_6 = arith.constant 0 : index
    %c0_7 = arith.constant 0 : index
    %6 = vector.load %arg3[%c0_6, %c0_7] : memref<1x32xf32, #tpu.memory_space<vmem>>, vector<1x32xf32>
    %cst = arith.constant 0.000000e+00 : f32
    %7 = vector.broadcast %cst : f32 to vector<8x32xf32>
    %c0_8 = arith.constant 0 : index
    %c0_9 = arith.constant 0 : index
    %c0_10 = arith.constant 0 : index
    %c0_11 = arith.constant 0 : index
    %8 = vector.load %arg0[%c0_8, %c0_9, %c0_10, %c0_11] : memref<8x3x8x32xf32, #tpu.memory_space<vmem>>, vector<1x1x8x32xf32>
    %9 = vector.shape_cast %8 : vector<1x1x8x32xf32> to vector<8x32xf32>
    %c0_12 = arith.constant 0 : index
    %c1_13 = arith.constant 1 : index
    %c0_14 = arith.constant 0 : index
    %c0_15 = arith.constant 0 : index
    %10 = vector.load %arg0[%c0_12, %c1_13, %c0_14, %c0_15] : memref<8x3x8x32xf32, #tpu.memory_space<vmem>>, vector<1x1x8x32xf32>
    %11 = vector.shape_cast %10 : vector<1x1x8x32xf32> to vector<8x32xf32>
    %c0_16 = arith.constant 0 : index
    %c2_17 = arith.constant 2 : index
    %c0_18 = arith.constant 0 : index
    %c0_19 = arith.constant 0 : index
    %12 = vector.load %arg0[%c0_16, %c2_17, %c0_18, %c0_19] : memref<8x3x8x32xf32, #tpu.memory_space<vmem>>, vector<1x1x8x32xf32>
    %13 = vector.shape_cast %12 : vector<1x1x8x32xf32> to vector<8x32xf32>
    %cst_20 = arith.constant dense<0.000000e+00> : vector<8x32xf32>
    %14 = tpu.matmul %7, %1, %cst_20 {dimension_numbers = #tpu.dot_dimension_numbers<[1], [0], [0], [1], [0, 0, 1, 1], [], []>} : vector<8x32xf32>, vector<32x32xf32>, vector<8x32xf32> -> vector<8x32xf32>
    %15 = arith.addf %9, %14 : vector<8x32xf32>
    %16 = arith.negf %15 : vector<8x32xf32>
    %17 = math.exp %16 : vector<8x32xf32>
    %cst_21 = arith.constant 1.000000e+00 : f32
    %18 = vector.broadcast %cst_21 : f32 to vector<8x32xf32>
    %19 = arith.addf %18, %17 : vector<8x32xf32>
    %20 = arith.divf %18, %19 : vector<8x32xf32>
    %cst_22 = arith.constant dense<0.000000e+00> : vector<8x32xf32>
    %21 = tpu.matmul %7, %3, %cst_22 {dimension_numbers = #tpu.dot_dimension_numbers<[1], [0], [0], [1], [0, 0, 1, 1], [], []>} : vector<8x32xf32>, vector<32x32xf32>, vector<8x32xf32> -> vector<8x32xf32>
    %22 = arith.addf %11, %21 : vector<8x32xf32>
    %23 = arith.negf %22 : vector<8x32xf32>
    %24 = math.exp %23 : vector<8x32xf32>
    %cst_23 = arith.constant 1.000000e+00 : f32
    %25 = vector.broadcast %cst_23 : f32 to vector<8x32xf32>
    %26 = arith.addf %25, %24 : vector<8x32xf32>
    %27 = arith.divf %25, %26 : vector<8x32xf32>
    %cst_24 = arith.constant dense<0.000000e+00> : vector<8x32xf32>
    %28 = tpu.matmul %7, %5, %cst_24 {dimension_numbers = #tpu.dot_dimension_numbers<[1], [0], [0], [1], [0, 0, 1, 1], [], []>} : vector<8x32xf32>, vector<32x32xf32>, vector<8x32xf32> -> vector<8x32xf32>
    %29 = vector.broadcast %6 : vector<1x32xf32> to vector<8x32xf32>
    %30 = arith.addf %28, %29 : vector<8x32xf32>
    %31 = arith.mulf %20, %30 : vector<8x32xf32>
    %32 = arith.addf %13, %31 : vector<8x32xf32>
    %33 = math.tanh %32 : vector<8x32xf32>
    %cst_25 = arith.constant 1.000000e+00 : f32
    %34 = vector.broadcast %cst_25 : f32 to vector<8x32xf32>
    %35 = arith.subf %34, %27 : vector<8x32xf32>
    %36 = arith.mulf %35, %33 : vector<8x32xf32>
    %37 = arith.mulf %27, %7 : vector<8x32xf32>
    %38 = arith.addf %36, %37 : vector<8x32xf32>
    %c0_26 = arith.constant 0 : index
    %c0_27 = arith.constant 0 : index
    %c0_28 = arith.constant 0 : index
    %39 = vector.load %arg1[%c0_26, %c0_27, %c0_28] : memref<8x8x1xf32, #tpu.memory_space<vmem>>, vector<1x8x1xf32>
    %40 = vector.shape_cast %39 : vector<1x8x1xf32> to vector<8x1xf32>
    %41 = arith.subf %38, %7 : vector<8x32xf32>
    %42 = vector.broadcast %40 : vector<8x1xf32> to vector<8x32xf32>
    %43 = arith.mulf %42, %41 : vector<8x32xf32>
    %44 = arith.addf %7, %43 : vector<8x32xf32>
    %c1_29 = arith.constant 1 : index
    %c0_30 = arith.constant 0 : index
    %c0_31 = arith.constant 0 : index
    %c0_32 = arith.constant 0 : index
    %45 = vector.load %arg0[%c1_29, %c0_30, %c0_31, %c0_32] : memref<8x3x8x32xf32, #tpu.memory_space<vmem>>, vector<1x1x8x32xf32>
    %46 = vector.shape_cast %45 : vector<1x1x8x32xf32> to vector<8x32xf32>
    %c1_33 = arith.constant 1 : index
    %c1_34 = arith.constant 1 : index
    %c0_35 = arith.constant 0 : index
    %c0_36 = arith.constant 0 : index
    %47 = vector.load %arg0[%c1_33, %c1_34, %c0_35, %c0_36] : memref<8x3x8x32xf32, #tpu.memory_space<vmem>>, vector<1x1x8x32xf32>
    %48 = vector.shape_cast %47 : vector<1x1x8x32xf32> to vector<8x32xf32>
    %c1_37 = arith.constant 1 : index
    %c2_38 = arith.constant 2 : index
    %c0_39 = arith.constant 0 : index
    %c0_40 = arith.constant 0 : index
    %49 = vector.load %arg0[%c1_37, %c2_38, %c0_39, %c0_40] : memref<8x3x8x32xf32, #tpu.memory_space<vmem>>, vector<1x1x8x32xf32>
    %50 = vector.shape_cast %49 : vector<1x1x8x32xf32> to vector<8x32xf32>
    %cst_41 = arith.constant dense<0.000000e+00> : vector<8x32xf32>
    %51 = tpu.matmul %44, %1, %cst_41 {dimension_numbers = #tpu.dot_dimension_numbers<[1], [0], [0], [1], [0, 0, 1, 1], [], []>} : vector<8x32xf32>, vector<32x32xf32>, vector<8x32xf32> -> vector<8x32xf32>
    %52 = arith.addf %46, %51 : vector<8x32xf32>
    %53 = arith.negf %52 : vector<8x32xf32>
    %54 = math.exp %53 : vector<8x32xf32>
    %cst_42 = arith.constant 1.000000e+00 : f32
    %55 = vector.broadcast %cst_42 : f32 to vector<8x32xf32>
    %56 = arith.addf %55, %54 : vector<8x32xf32>
    %57 = arith.divf %55, %56 : vector<8x32xf32>
    %cst_43 = arith.constant dense<0.000000e+00> : vector<8x32xf32>
    %58 = tpu.matmul %44, %3, %cst_43 {dimension_numbers = #tpu.dot_dimension_numbers<[1], [0], [0], [1], [0, 0, 1, 1], [], []>} : vector<8x32xf32>, vector<32x32xf32>, vector<8x32xf32> -> vector<8x32xf32>
    %59 = arith.addf %48, %58 : vector<8x32xf32>
    %60 = arith.negf %59 : vector<8x32xf32>
    %61 = math.exp %60 : vector<8x32xf32>
    %cst_44 = arith.constant 1.000000e+00 : f32
    %62 = vector.broadcast %cst_44 : f32 to vector<8x32xf32>
    %63 = arith.addf %62, %61 : vector<8x32xf32>
    %64 = arith.divf %62, %63 : vector<8x32xf32>
    %cst_45 = arith.constant dense<0.000000e+00> : vector<8x32xf32>
    %65 = tpu.matmul %44, %5, %cst_45 {dimension_numbers = #tpu.dot_dimension_numbers<[1], [0], [0], [1], [0, 0, 1, 1], [], []>} : vector<8x32xf32>, vector<32x32xf32>, vector<8x32xf32> -> vector<8x32xf32>
    %66 = vector.broadcast %6 : vector<1x32xf32> to vector<8x32xf32>
    %67 = arith.addf %65, %66 : vector<8x32xf32>
    %68 = arith.mulf %57, %67 : vector<8x32xf32>
    %69 = arith.addf %50, %68 : vector<8x32xf32>
    %70 = math.tanh %69 : vector<8x32xf32>
    %cst_46 = arith.constant 1.000000e+00 : f32
    %71 = vector.broadcast %cst_46 : f32 to vector<8x32xf32>
    %72 = arith.subf %71, %64 : vector<8x32xf32>
    %73 = arith.mulf %72, %70 : vector<8x32xf32>
    %74 = arith.mulf %64, %44 : vector<8x32xf32>
    %75 = arith.addf %73, %74 : vector<8x32xf32>
    %c1_47 = arith.constant 1 : index
    %c0_48 = arith.constant 0 : index
    %c0_49 = arith.constant 0 : index
    %76 = vector.load %arg1[%c1_47, %c0_48, %c0_49] : memref<8x8x1xf32, #tpu.memory_space<vmem>>, vector<1x8x1xf32>
    %77 = vector.shape_cast %76 : vector<1x8x1xf32> to vector<8x1xf32>
    %78 = arith.subf %75, %44 : vector<8x32xf32>
    %79 = vector.broadcast %77 : vector<8x1xf32> to vector<8x32xf32>
    %80 = arith.mulf %79, %78 : vector<8x32xf32>
    %81 = arith.addf %44, %80 : vector<8x32xf32>
    %c2_50 = arith.constant 2 : index
    %c0_51 = arith.constant 0 : index
    %c0_52 = arith.constant 0 : index
    %c0_53 = arith.constant 0 : index
    %82 = vector.load %arg0[%c2_50, %c0_51, %c0_52, %c0_53] : memref<8x3x8x32xf32, #tpu.memory_space<vmem>>, vector<1x1x8x32xf32>
    %83 = vector.shape_cast %82 : vector<1x1x8x32xf32> to vector<8x32xf32>
    %c2_54 = arith.constant 2 : index
    %c1_55 = arith.constant 1 : index
    %c0_56 = arith.constant 0 : index
    %c0_57 = arith.constant 0 : index
    %84 = vector.load %arg0[%c2_54, %c1_55, %c0_56, %c0_57] : memref<8x3x8x32xf32, #tpu.memory_space<vmem>>, vector<1x1x8x32xf32>
    %85 = vector.shape_cast %84 : vector<1x1x8x32xf32> to vector<8x32xf32>
    %c2_58 = arith.constant 2 : index
    %c2_59 = arith.constant 2 : index
    %c0_60 = arith.constant 0 : index
    %c0_61 = arith.constant 0 : index
    %86 = vector.load %arg0[%c2_58, %c2_59, %c0_60, %c0_61] : memref<8x3x8x32xf32, #tpu.memory_space<vmem>>, vector<1x1x8x32xf32>
    %87 = vector.shape_cast %86 : vector<1x1x8x32xf32> to vector<8x32xf32>
    %cst_62 = arith.constant dense<0.000000e+00> : vector<8x32xf32>
    %88 = tpu.matmul %81, %1, %cst_62 {dimension_numbers = #tpu.dot_dimension_numbers<[1], [0], [0], [1], [0, 0, 1, 1], [], []>} : vector<8x32xf32>, vector<32x32xf32>, vector<8x32xf32> -> vector<8x32xf32>
    %89 = arith.addf %83, %88 : vector<8x32xf32>
    %90 = arith.negf %89 : vector<8x32xf32>
    %91 = math.exp %90 : vector<8x32xf32>
    %cst_63 = arith.constant 1.000000e+00 : f32
    %92 = vector.broadcast %cst_63 : f32 to vector<8x32xf32>
    %93 = arith.addf %92, %91 : vector<8x32xf32>
    %94 = arith.divf %92, %93 : vector<8x32xf32>
    %cst_64 = arith.constant dense<0.000000e+00> : vector<8x32xf32>
    %95 = tpu.matmul %81, %3, %cst_64 {dimension_numbers = #tpu.dot_dimension_numbers<[1], [0], [0], [1], [0, 0, 1, 1], [], []>} : vector<8x32xf32>, vector<32x32xf32>, vector<8x32xf32> -> vector<8x32xf32>
    %96 = arith.addf %85, %95 : vector<8x32xf32>
    %97 = arith.negf %96 : vector<8x32xf32>
    %98 = math.exp %97 : vector<8x32xf32>
    %cst_65 = arith.constant 1.000000e+00 : f32
    %99 = vector.broadcast %cst_65 : f32 to vector<8x32xf32>
    %100 = arith.addf %99, %98 : vector<8x32xf32>
    %101 = arith.divf %99, %100 : vector<8x32xf32>
    %cst_66 = arith.constant dense<0.000000e+00> : vector<8x32xf32>
    %102 = tpu.matmul %81, %5, %cst_66 {dimension_numbers = #tpu.dot_dimension_numbers<[1], [0], [0], [1], [0, 0, 1, 1], [], []>} : vector<8x32xf32>, vector<32x32xf32>, vector<8x32xf32> -> vector<8x32xf32>
    %103 = vector.broadcast %6 : vector<1x32xf32> to vector<8x32xf32>
    %104 = arith.addf %102, %103 : vector<8x32xf32>
    %105 = arith.mulf %94, %104 : vector<8x32xf32>
    %106 = arith.addf %87, %105 : vector<8x32xf32>
    %107 = math.tanh %106 : vector<8x32xf32>
    %cst_67 = arith.constant 1.000000e+00 : f32
    %108 = vector.broadcast %cst_67 : f32 to vector<8x32xf32>
    %109 = arith.subf %108, %101 : vector<8x32xf32>
    %110 = arith.mulf %109, %107 : vector<8x32xf32>
    %111 = arith.mulf %101, %81 : vector<8x32xf32>
    %112 = arith.addf %110, %111 : vector<8x32xf32>
    %c2_68 = arith.constant 2 : index
    %c0_69 = arith.constant 0 : index
    %c0_70 = arith.constant 0 : index
    %113 = vector.load %arg1[%c2_68, %c0_69, %c0_70] : memref<8x8x1xf32, #tpu.memory_space<vmem>>, vector<1x8x1xf32>
    %114 = vector.shape_cast %113 : vector<1x8x1xf32> to vector<8x1xf32>
    %115 = arith.subf %112, %81 : vector<8x32xf32>
    %116 = vector.broadcast %114 : vector<8x1xf32> to vector<8x32xf32>
    %117 = arith.mulf %116, %115 : vector<8x32xf32>
    %118 = arith.addf %81, %117 : vector<8x32xf32>
    %c3 = arith.constant 3 : index
    %c0_71 = arith.constant 0 : index
    %c0_72 = arith.constant 0 : index
    %c0_73 = arith.constant 0 : index
    %119 = vector.load %arg0[%c3, %c0_71, %c0_72, %c0_73] : memref<8x3x8x32xf32, #tpu.memory_space<vmem>>, vector<1x1x8x32xf32>
    %120 = vector.shape_cast %119 : vector<1x1x8x32xf32> to vector<8x32xf32>
    %c3_74 = arith.constant 3 : index
    %c1_75 = arith.constant 1 : index
    %c0_76 = arith.constant 0 : index
    %c0_77 = arith.constant 0 : index
    %121 = vector.load %arg0[%c3_74, %c1_75, %c0_76, %c0_77] : memref<8x3x8x32xf32, #tpu.memory_space<vmem>>, vector<1x1x8x32xf32>
    %122 = vector.shape_cast %121 : vector<1x1x8x32xf32> to vector<8x32xf32>
    %c3_78 = arith.constant 3 : index
    %c2_79 = arith.constant 2 : index
    %c0_80 = arith.constant 0 : index
    %c0_81 = arith.constant 0 : index
    %123 = vector.load %arg0[%c3_78, %c2_79, %c0_80, %c0_81] : memref<8x3x8x32xf32, #tpu.memory_space<vmem>>, vector<1x1x8x32xf32>
    %124 = vector.shape_cast %123 : vector<1x1x8x32xf32> to vector<8x32xf32>
    %cst_82 = arith.constant dense<0.000000e+00> : vector<8x32xf32>
    %125 = tpu.matmul %118, %1, %cst_82 {dimension_numbers = #tpu.dot_dimension_numbers<[1], [0], [0], [1], [0, 0, 1, 1], [], []>} : vector<8x32xf32>, vector<32x32xf32>, vector<8x32xf32> -> vector<8x32xf32>
    %126 = arith.addf %120, %125 : vector<8x32xf32>
    %127 = arith.negf %126 : vector<8x32xf32>
    %128 = math.exp %127 : vector<8x32xf32>
    %cst_83 = arith.constant 1.000000e+00 : f32
    %129 = vector.broadcast %cst_83 : f32 to vector<8x32xf32>
    %130 = arith.addf %129, %128 : vector<8x32xf32>
    %131 = arith.divf %129, %130 : vector<8x32xf32>
    %cst_84 = arith.constant dense<0.000000e+00> : vector<8x32xf32>
    %132 = tpu.matmul %118, %3, %cst_84 {dimension_numbers = #tpu.dot_dimension_numbers<[1], [0], [0], [1], [0, 0, 1, 1], [], []>} : vector<8x32xf32>, vector<32x32xf32>, vector<8x32xf32> -> vector<8x32xf32>
    %133 = arith.addf %122, %132 : vector<8x32xf32>
    %134 = arith.negf %133 : vector<8x32xf32>
    %135 = math.exp %134 : vector<8x32xf32>
    %cst_85 = arith.constant 1.000000e+00 : f32
    %136 = vector.broadcast %cst_85 : f32 to vector<8x32xf32>
    %137 = arith.addf %136, %135 : vector<8x32xf32>
    %138 = arith.divf %136, %137 : vector<8x32xf32>
    %cst_86 = arith.constant dense<0.000000e+00> : vector<8x32xf32>
    %139 = tpu.matmul %118, %5, %cst_86 {dimension_numbers = #tpu.dot_dimension_numbers<[1], [0], [0], [1], [0, 0, 1, 1], [], []>} : vector<8x32xf32>, vector<32x32xf32>, vector<8x32xf32> -> vector<8x32xf32>
    %140 = vector.broadcast %6 : vector<1x32xf32> to vector<8x32xf32>
    %141 = arith.addf %139, %140 : vector<8x32xf32>
    %142 = arith.mulf %131, %141 : vector<8x32xf32>
    %143 = arith.addf %124, %142 : vector<8x32xf32>
    %144 = math.tanh %143 : vector<8x32xf32>
    %cst_87 = arith.constant 1.000000e+00 : f32
    %145 = vector.broadcast %cst_87 : f32 to vector<8x32xf32>
    %146 = arith.subf %145, %138 : vector<8x32xf32>
    %147 = arith.mulf %146, %144 : vector<8x32xf32>
    %148 = arith.mulf %138, %118 : vector<8x32xf32>
    %149 = arith.addf %147, %148 : vector<8x32xf32>
    %c3_88 = arith.constant 3 : index
    %c0_89 = arith.constant 0 : index
    %c0_90 = arith.constant 0 : index
    %150 = vector.load %arg1[%c3_88, %c0_89, %c0_90] : memref<8x8x1xf32, #tpu.memory_space<vmem>>, vector<1x8x1xf32>
    %151 = vector.shape_cast %150 : vector<1x8x1xf32> to vector<8x1xf32>
    %152 = arith.subf %149, %118 : vector<8x32xf32>
    %153 = vector.broadcast %151 : vector<8x1xf32> to vector<8x32xf32>
    %154 = arith.mulf %153, %152 : vector<8x32xf32>
    %155 = arith.addf %118, %154 : vector<8x32xf32>
    %c4 = arith.constant 4 : index
    %c0_91 = arith.constant 0 : index
    %c0_92 = arith.constant 0 : index
    %c0_93 = arith.constant 0 : index
    %156 = vector.load %arg0[%c4, %c0_91, %c0_92, %c0_93] : memref<8x3x8x32xf32, #tpu.memory_space<vmem>>, vector<1x1x8x32xf32>
    %157 = vector.shape_cast %156 : vector<1x1x8x32xf32> to vector<8x32xf32>
    %c4_94 = arith.constant 4 : index
    %c1_95 = arith.constant 1 : index
    %c0_96 = arith.constant 0 : index
    %c0_97 = arith.constant 0 : index
    %158 = vector.load %arg0[%c4_94, %c1_95, %c0_96, %c0_97] : memref<8x3x8x32xf32, #tpu.memory_space<vmem>>, vector<1x1x8x32xf32>
    %159 = vector.shape_cast %158 : vector<1x1x8x32xf32> to vector<8x32xf32>
    %c4_98 = arith.constant 4 : index
    %c2_99 = arith.constant 2 : index
    %c0_100 = arith.constant 0 : index
    %c0_101 = arith.constant 0 : index
    %160 = vector.load %arg0[%c4_98, %c2_99, %c0_100, %c0_101] : memref<8x3x8x32xf32, #tpu.memory_space<vmem>>, vector<1x1x8x32xf32>
    %161 = vector.shape_cast %160 : vector<1x1x8x32xf32> to vector<8x32xf32>
    %cst_102 = arith.constant dense<0.000000e+00> : vector<8x32xf32>
    %162 = tpu.matmul %155, %1, %cst_102 {dimension_numbers = #tpu.dot_dimension_numbers<[1], [0], [0], [1], [0, 0, 1, 1], [], []>} : vector<8x32xf32>, vector<32x32xf32>, vector<8x32xf32> -> vector<8x32xf32>
    %163 = arith.addf %157, %162 : vector<8x32xf32>
    %164 = arith.negf %163 : vector<8x32xf32>
    %165 = math.exp %164 : vector<8x32xf32>
    %cst_103 = arith.constant 1.000000e+00 : f32
    %166 = vector.broadcast %cst_103 : f32 to vector<8x32xf32>
    %167 = arith.addf %166, %165 : vector<8x32xf32>
    %168 = arith.divf %166, %167 : vector<8x32xf32>
    %cst_104 = arith.constant dense<0.000000e+00> : vector<8x32xf32>
    %169 = tpu.matmul %155, %3, %cst_104 {dimension_numbers = #tpu.dot_dimension_numbers<[1], [0], [0], [1], [0, 0, 1, 1], [], []>} : vector<8x32xf32>, vector<32x32xf32>, vector<8x32xf32> -> vector<8x32xf32>
    %170 = arith.addf %159, %169 : vector<8x32xf32>
    %171 = arith.negf %170 : vector<8x32xf32>
    %172 = math.exp %171 : vector<8x32xf32>
    %cst_105 = arith.constant 1.000000e+00 : f32
    %173 = vector.broadcast %cst_105 : f32 to vector<8x32xf32>
    %174 = arith.addf %173, %172 : vector<8x32xf32>
    %175 = arith.divf %173, %174 : vector<8x32xf32>
    %cst_106 = arith.constant dense<0.000000e+00> : vector<8x32xf32>
    %176 = tpu.matmul %155, %5, %cst_106 {dimension_numbers = #tpu.dot_dimension_numbers<[1], [0], [0], [1], [0, 0, 1, 1], [], []>} : vector<8x32xf32>, vector<32x32xf32>, vector<8x32xf32> -> vector<8x32xf32>
    %177 = vector.broadcast %6 : vector<1x32xf32> to vector<8x32xf32>
    %178 = arith.addf %176, %177 : vector<8x32xf32>
    %179 = arith.mulf %168, %178 : vector<8x32xf32>
    %180 = arith.addf %161, %179 : vector<8x32xf32>
    %181 = math.tanh %180 : vector<8x32xf32>
    %cst_107 = arith.constant 1.000000e+00 : f32
    %182 = vector.broadcast %cst_107 : f32 to vector<8x32xf32>
    %183 = arith.subf %182, %175 : vector<8x32xf32>
    %184 = arith.mulf %183, %181 : vector<8x32xf32>
    %185 = arith.mulf %175, %155 : vector<8x32xf32>
    %186 = arith.addf %184, %185 : vector<8x32xf32>
    %c4_108 = arith.constant 4 : index
    %c0_109 = arith.constant 0 : index
    %c0_110 = arith.constant 0 : index
    %187 = vector.load %arg1[%c4_108, %c0_109, %c0_110] : memref<8x8x1xf32, #tpu.memory_space<vmem>>, vector<1x8x1xf32>
    %188 = vector.shape_cast %187 : vector<1x8x1xf32> to vector<8x1xf32>
    %189 = arith.subf %186, %155 : vector<8x32xf32>
    %190 = vector.broadcast %188 : vector<8x1xf32> to vector<8x32xf32>
    %191 = arith.mulf %190, %189 : vector<8x32xf32>
    %192 = arith.addf %155, %191 : vector<8x32xf32>
    %c5 = arith.constant 5 : index
    %c0_111 = arith.constant 0 : index
    %c0_112 = arith.constant 0 : index
    %c0_113 = arith.constant 0 : index
    %193 = vector.load %arg0[%c5, %c0_111, %c0_112, %c0_113] : memref<8x3x8x32xf32, #tpu.memory_space<vmem>>, vector<1x1x8x32xf32>
    %194 = vector.shape_cast %193 : vector<1x1x8x32xf32> to vector<8x32xf32>
    %c5_114 = arith.constant 5 : index
    %c1_115 = arith.constant 1 : index
    %c0_116 = arith.constant 0 : index
    %c0_117 = arith.constant 0 : index
    %195 = vector.load %arg0[%c5_114, %c1_115, %c0_116, %c0_117] : memref<8x3x8x32xf32, #tpu.memory_space<vmem>>, vector<1x1x8x32xf32>
    %196 = vector.shape_cast %195 : vector<1x1x8x32xf32> to vector<8x32xf32>
    %c5_118 = arith.constant 5 : index
    %c2_119 = arith.constant 2 : index
    %c0_120 = arith.constant 0 : index
    %c0_121 = arith.constant 0 : index
    %197 = vector.load %arg0[%c5_118, %c2_119, %c0_120, %c0_121] : memref<8x3x8x32xf32, #tpu.memory_space<vmem>>, vector<1x1x8x32xf32>
    %198 = vector.shape_cast %197 : vector<1x1x8x32xf32> to vector<8x32xf32>
    %cst_122 = arith.constant dense<0.000000e+00> : vector<8x32xf32>
    %199 = tpu.matmul %192, %1, %cst_122 {dimension_numbers = #tpu.dot_dimension_numbers<[1], [0], [0], [1], [0, 0, 1, 1], [], []>} : vector<8x32xf32>, vector<32x32xf32>, vector<8x32xf32> -> vector<8x32xf32>
    %200 = arith.addf %194, %199 : vector<8x32xf32>
    %201 = arith.negf %200 : vector<8x32xf32>
    %202 = math.exp %201 : vector<8x32xf32>
    %cst_123 = arith.constant 1.000000e+00 : f32
    %203 = vector.broadcast %cst_123 : f32 to vector<8x32xf32>
    %204 = arith.addf %203, %202 : vector<8x32xf32>
    %205 = arith.divf %203, %204 : vector<8x32xf32>
    %cst_124 = arith.constant dense<0.000000e+00> : vector<8x32xf32>
    %206 = tpu.matmul %192, %3, %cst_124 {dimension_numbers = #tpu.dot_dimension_numbers<[1], [0], [0], [1], [0, 0, 1, 1], [], []>} : vector<8x32xf32>, vector<32x32xf32>, vector<8x32xf32> -> vector<8x32xf32>
    %207 = arith.addf %196, %206 : vector<8x32xf32>
    %208 = arith.negf %207 : vector<8x32xf32>
    %209 = math.exp %208 : vector<8x32xf32>
    %cst_125 = arith.constant 1.000000e+00 : f32
    %210 = vector.broadcast %cst_125 : f32 to vector<8x32xf32>
    %211 = arith.addf %210, %209 : vector<8x32xf32>
    %212 = arith.divf %210, %211 : vector<8x32xf32>
    %cst_126 = arith.constant dense<0.000000e+00> : vector<8x32xf32>
    %213 = tpu.matmul %192, %5, %cst_126 {dimension_numbers = #tpu.dot_dimension_numbers<[1], [0], [0], [1], [0, 0, 1, 1], [], []>} : vector<8x32xf32>, vector<32x32xf32>, vector<8x32xf32> -> vector<8x32xf32>
    %214 = vector.broadcast %6 : vector<1x32xf32> to vector<8x32xf32>
    %215 = arith.addf %213, %214 : vector<8x32xf32>
    %216 = arith.mulf %205, %215 : vector<8x32xf32>
    %217 = arith.addf %198, %216 : vector<8x32xf32>
    %218 = math.tanh %217 : vector<8x32xf32>
    %cst_127 = arith.constant 1.000000e+00 : f32
    %219 = vector.broadcast %cst_127 : f32 to vector<8x32xf32>
    %220 = arith.subf %219, %212 : vector<8x32xf32>
    %221 = arith.mulf %220, %218 : vector<8x32xf32>
    %222 = arith.mulf %212, %192 : vector<8x32xf32>
    %223 = arith.addf %221, %222 : vector<8x32xf32>
    %c5_128 = arith.constant 5 : index
    %c0_129 = arith.constant 0 : index
    %c0_130 = arith.constant 0 : index
    %224 = vector.load %arg1[%c5_128, %c0_129, %c0_130] : memref<8x8x1xf32, #tpu.memory_space<vmem>>, vector<1x8x1xf32>
    %225 = vector.shape_cast %224 : vector<1x8x1xf32> to vector<8x1xf32>
    %226 = arith.subf %223, %192 : vector<8x32xf32>
    %227 = vector.broadcast %225 : vector<8x1xf32> to vector<8x32xf32>
    %228 = arith.mulf %227, %226 : vector<8x32xf32>
    %229 = arith.addf %192, %228 : vector<8x32xf32>
    %c6 = arith.constant 6 : index
    %c0_131 = arith.constant 0 : index
    %c0_132 = arith.constant 0 : index
    %c0_133 = arith.constant 0 : index
    %230 = vector.load %arg0[%c6, %c0_131, %c0_132, %c0_133] : memref<8x3x8x32xf32, #tpu.memory_space<vmem>>, vector<1x1x8x32xf32>
    %231 = vector.shape_cast %230 : vector<1x1x8x32xf32> to vector<8x32xf32>
    %c6_134 = arith.constant 6 : index
    %c1_135 = arith.constant 1 : index
    %c0_136 = arith.constant 0 : index
    %c0_137 = arith.constant 0 : index
    %232 = vector.load %arg0[%c6_134, %c1_135, %c0_136, %c0_137] : memref<8x3x8x32xf32, #tpu.memory_space<vmem>>, vector<1x1x8x32xf32>
    %233 = vector.shape_cast %232 : vector<1x1x8x32xf32> to vector<8x32xf32>
    %c6_138 = arith.constant 6 : index
    %c2_139 = arith.constant 2 : index
    %c0_140 = arith.constant 0 : index
    %c0_141 = arith.constant 0 : index
    %234 = vector.load %arg0[%c6_138, %c2_139, %c0_140, %c0_141] : memref<8x3x8x32xf32, #tpu.memory_space<vmem>>, vector<1x1x8x32xf32>
    %235 = vector.shape_cast %234 : vector<1x1x8x32xf32> to vector<8x32xf32>
    %cst_142 = arith.constant dense<0.000000e+00> : vector<8x32xf32>
    %236 = tpu.matmul %229, %1, %cst_142 {dimension_numbers = #tpu.dot_dimension_numbers<[1], [0], [0], [1], [0, 0, 1, 1], [], []>} : vector<8x32xf32>, vector<32x32xf32>, vector<8x32xf32> -> vector<8x32xf32>
    %237 = arith.addf %231, %236 : vector<8x32xf32>
    %238 = arith.negf %237 : vector<8x32xf32>
    %239 = math.exp %238 : vector<8x32xf32>
    %cst_143 = arith.constant 1.000000e+00 : f32
    %240 = vector.broadcast %cst_143 : f32 to vector<8x32xf32>
    %241 = arith.addf %240, %239 : vector<8x32xf32>
    %242 = arith.divf %240, %241 : vector<8x32xf32>
    %cst_144 = arith.constant dense<0.000000e+00> : vector<8x32xf32>
    %243 = tpu.matmul %229, %3, %cst_144 {dimension_numbers = #tpu.dot_dimension_numbers<[1], [0], [0], [1], [0, 0, 1, 1], [], []>} : vector<8x32xf32>, vector<32x32xf32>, vector<8x32xf32> -> vector<8x32xf32>
    %244 = arith.addf %233, %243 : vector<8x32xf32>
    %245 = arith.negf %244 : vector<8x32xf32>
    %246 = math.exp %245 : vector<8x32xf32>
    %cst_145 = arith.constant 1.000000e+00 : f32
    %247 = vector.broadcast %cst_145 : f32 to vector<8x32xf32>
    %248 = arith.addf %247, %246 : vector<8x32xf32>
    %249 = arith.divf %247, %248 : vector<8x32xf32>
    %cst_146 = arith.constant dense<0.000000e+00> : vector<8x32xf32>
    %250 = tpu.matmul %229, %5, %cst_146 {dimension_numbers = #tpu.dot_dimension_numbers<[1], [0], [0], [1], [0, 0, 1, 1], [], []>} : vector<8x32xf32>, vector<32x32xf32>, vector<8x32xf32> -> vector<8x32xf32>
    %251 = vector.broadcast %6 : vector<1x32xf32> to vector<8x32xf32>
    %252 = arith.addf %250, %251 : vector<8x32xf32>
    %253 = arith.mulf %242, %252 : vector<8x32xf32>
    %254 = arith.addf %235, %253 : vector<8x32xf32>
    %255 = math.tanh %254 : vector<8x32xf32>
    %cst_147 = arith.constant 1.000000e+00 : f32
    %256 = vector.broadcast %cst_147 : f32 to vector<8x32xf32>
    %257 = arith.subf %256, %249 : vector<8x32xf32>
    %258 = arith.mulf %257, %255 : vector<8x32xf32>
    %259 = arith.mulf %249, %229 : vector<8x32xf32>
    %260 = arith.addf %258, %259 : vector<8x32xf32>
    %c6_148 = arith.constant 6 : index
    %c0_149 = arith.constant 0 : index
    %c0_150 = arith.constant 0 : index
    %261 = vector.load %arg1[%c6_148, %c0_149, %c0_150] : memref<8x8x1xf32, #tpu.memory_space<vmem>>, vector<1x8x1xf32>
    %262 = vector.shape_cast %261 : vector<1x8x1xf32> to vector<8x1xf32>
    %263 = arith.subf %260, %229 : vector<8x32xf32>
    %264 = vector.broadcast %262 : vector<8x1xf32> to vector<8x32xf32>
    %265 = arith.mulf %264, %263 : vector<8x32xf32>
    %266 = arith.addf %229, %265 : vector<8x32xf32>
    %c7 = arith.constant 7 : index
    %c0_151 = arith.constant 0 : index
    %c0_152 = arith.constant 0 : index
    %c0_153 = arith.constant 0 : index
    %267 = vector.load %arg0[%c7, %c0_151, %c0_152, %c0_153] : memref<8x3x8x32xf32, #tpu.memory_space<vmem>>, vector<1x1x8x32xf32>
    %268 = vector.shape_cast %267 : vector<1x1x8x32xf32> to vector<8x32xf32>
    %c7_154 = arith.constant 7 : index
    %c1_155 = arith.constant 1 : index
    %c0_156 = arith.constant 0 : index
    %c0_157 = arith.constant 0 : index
    %269 = vector.load %arg0[%c7_154, %c1_155, %c0_156, %c0_157] : memref<8x3x8x32xf32, #tpu.memory_space<vmem>>, vector<1x1x8x32xf32>
    %270 = vector.shape_cast %269 : vector<1x1x8x32xf32> to vector<8x32xf32>
    %c7_158 = arith.constant 7 : index
    %c2_159 = arith.constant 2 : index
    %c0_160 = arith.constant 0 : index
    %c0_161 = arith.constant 0 : index
    %271 = vector.load %arg0[%c7_158, %c2_159, %c0_160, %c0_161] : memref<8x3x8x32xf32, #tpu.memory_space<vmem>>, vector<1x1x8x32xf32>
    %272 = vector.shape_cast %271 : vector<1x1x8x32xf32> to vector<8x32xf32>
    %cst_162 = arith.constant dense<0.000000e+00> : vector<8x32xf32>
    %273 = tpu.matmul %266, %1, %cst_162 {dimension_numbers = #tpu.dot_dimension_numbers<[1], [0], [0], [1], [0, 0, 1, 1], [], []>} : vector<8x32xf32>, vector<32x32xf32>, vector<8x32xf32> -> vector<8x32xf32>
    %274 = arith.addf %268, %273 : vector<8x32xf32>
    %275 = arith.negf %274 : vector<8x32xf32>
    %276 = math.exp %275 : vector<8x32xf32>
    %cst_163 = arith.constant 1.000000e+00 : f32
    %277 = vector.broadcast %cst_163 : f32 to vector<8x32xf32>
    %278 = arith.addf %277, %276 : vector<8x32xf32>
    %279 = arith.divf %277, %278 : vector<8x32xf32>
    %cst_164 = arith.constant dense<0.000000e+00> : vector<8x32xf32>
    %280 = tpu.matmul %266, %3, %cst_164 {dimension_numbers = #tpu.dot_dimension_numbers<[1], [0], [0], [1], [0, 0, 1, 1], [], []>} : vector<8x32xf32>, vector<32x32xf32>, vector<8x32xf32> -> vector<8x32xf32>
    %281 = arith.addf %270, %280 : vector<8x32xf32>
    %282 = arith.negf %281 : vector<8x32xf32>
    %283 = math.exp %282 : vector<8x32xf32>
    %cst_165 = arith.constant 1.000000e+00 : f32
    %284 = vector.broadcast %cst_165 : f32 to vector<8x32xf32>
    %285 = arith.addf %284, %283 : vector<8x32xf32>
    %286 = arith.divf %284, %285 : vector<8x32xf32>
    %cst_166 = arith.constant dense<0.000000e+00> : vector<8x32xf32>
    %287 = tpu.matmul %266, %5, %cst_166 {dimension_numbers = #tpu.dot_dimension_numbers<[1], [0], [0], [1], [0, 0, 1, 1], [], []>} : vector<8x32xf32>, vector<32x32xf32>, vector<8x32xf32> -> vector<8x32xf32>
    %288 = vector.broadcast %6 : vector<1x32xf32> to vector<8x32xf32>
    %289 = arith.addf %287, %288 : vector<8x32xf32>
    %290 = arith.mulf %279, %289 : vector<8x32xf32>
    %291 = arith.addf %272, %290 : vector<8x32xf32>
    %292 = math.tanh %291 : vector<8x32xf32>
    %cst_167 = arith.constant 1.000000e+00 : f32
    %293 = vector.broadcast %cst_167 : f32 to vector<8x32xf32>
    %294 = arith.subf %293, %286 : vector<8x32xf32>
    %295 = arith.mulf %294, %292 : vector<8x32xf32>
    %296 = arith.mulf %286, %266 : vector<8x32xf32>
    %297 = arith.addf %295, %296 : vector<8x32xf32>
    %c7_168 = arith.constant 7 : index
    %c0_169 = arith.constant 0 : index
    %c0_170 = arith.constant 0 : index
    %298 = vector.load %arg1[%c7_168, %c0_169, %c0_170] : memref<8x8x1xf32, #tpu.memory_space<vmem>>, vector<1x8x1xf32>
    %299 = vector.shape_cast %298 : vector<1x8x1xf32> to vector<8x1xf32>
    %300 = arith.subf %297, %266 : vector<8x32xf32>
    %301 = vector.broadcast %299 : vector<8x1xf32> to vector<8x32xf32>
    %302 = arith.mulf %301, %300 : vector<8x32xf32>
    %303 = arith.addf %266, %302 : vector<8x32xf32>
    %c0_171 = arith.constant 0 : index
    %c0_172 = arith.constant 0 : index
    %304 = vector.load %arg4[%c0_171, %c0_172] : memref<8x32xf32, #tpu.memory_space<vmem>>, vector<8x32xf32>
    tpu.vector_store %arg4[%c0_171, %c0_172], %303 {strides = array<i32>} : memref<8x32xf32, #tpu.memory_space<vmem>>, vector<8x32xf32>,
    return
  }
}

</mosaic_0001>

<llo_original>
// kernel: tpu_custom_call.1
$region0: #{tpu_custom_call.1}
  #allocation0 [shape = 'u32[]', space=smem, size = 0x4, offset = 0x4, fixed_abs, tag = 'smem constant byte address 0x4 - core index']
  #allocation1 [shape = 'u32[144,128]{1,0:T(1,128)}', space=vmem, size = 0x12000, scoped, tag = 'internal scratch']
  %s0 = inlined_call_operand.hbm [shape: f32[8,3,8,32], index: 0, kind: input, shape index: {}]
  %s1 = inlined_call_operand.vmem [shape: f32[8,8,1], index: 1, kind: input, shape index: {}]
  %s2 = inlined_call_operand.hbm [shape: f32[3,32,32], index: 2, kind: input, shape index: {}]
  %s3 = inlined_call_operand.vmem [shape: f32[1,32], index: 3, kind: input, shape index: {}]
  %s4 = inlined_call_operand.hbm [shape: f32[8,32], index: 4, kind: output, shape index: {}]
  %s5 = sld [smem:[#allocation0]]
  $region34: #{tpu_custom_call.1} parent=0
    _
  %s7 = ssub.s32 1, %s5
  %s8 = scalar_select 0, %s7, %s5
  $region1: #{tpu_custom_call.1} parent=0
    #allocation2 [shape = 'u8[98304]{0}', space=vmem, size = 0x18000, scoped, tag = 'input window, operand 0, single buffered']
    #allocation3 [shape = 's32[1]{0}', space=sflag, size = 0x4, scoped, tag = 'scoped memory for tpu_custom_call.1']
    #allocation4 [shape = 's32[1]{0}', space=sflag, size = 0x4, scoped, tag = 'scoped memory for tpu_custom_call.1']
    #allocation5 [shape = 'u8[49152]{0}', space=vmem, size = 0xc000, scoped, tag = 'input window, operand 2, single buffered']
    #allocation6 [shape = 's32[1]{0}', space=sflag, size = 0x4, scoped, tag = 'scoped memory for tpu_custom_call.1']
    #allocation7 [shape = 'u8[4096]{0}', space=vmem, size = 0x1000, scoped, tag = 'output window, operand 0, single buffered']
    %9 = vsyncpa [#allocation3], 0
    %10 = vsyncpa [#allocation6], 0
    %11 = vsyncpa [#allocation4], 0
    // Predicated region
    $region2: #{tpu_custom_call.1} parent=1 // pred_check
      _
    $region3: #{tpu_custom_call.1} parent=1 // pred_check_branch
      %13 = sbr.rel (0) target = $region5
    $region4: #{tpu_custom_call.1} parent=1 // pred_region
      %s15 = ssub.s32 3072, 3072
      %16 = vsyncadd [#allocation3], %s15
      %s17 = sshll.u32 [#allocation2], 4
      %s18 = int_to_ptr.vmem [resolvable:$true] %s17
      %23 = dma.hbm_to_vmem [thread:$0]  %s0, 3072, %s18, [#allocation3], 128, 128, 8
    $region5: #{tpu_custom_call.1} parent=1 // pred_fallthru
      _
    // Predicated region
    $region6: #{tpu_custom_call.1} parent=1 // pred_check
      _
    $region7: #{tpu_custom_call.1} parent=1 // pred_check_branch
      %25 = sbr.rel (0) target = $region9
    $region8: #{tpu_custom_call.1} parent=1 // pred_region
      _
    $region9: #{tpu_custom_call.1} parent=1 // pred_fallthru
      _
    // Predicated region
    $region10: #{tpu_custom_call.1} parent=1 // pred_check
      _
    $region11: #{tpu_custom_call.1} parent=1 // pred_check_branch
      %27 = sbr.rel (0) target = $region13
    $region12: #{tpu_custom_call.1} parent=1 // pred_region
      %s29 = ssub.s32 1536, 1536
      %30 = vsyncadd [#allocation6], %s29
      %s31 = sshll.u32 [#allocation5], 4
      %s32 = int_to_ptr.vmem [resolvable:$true] %s31
      %37 = dma.hbm_to_vmem [thread:$0]  %s2, 1536, %s32, [#allocation6], 128, 128, 8
    $region13: #{tpu_custom_call.1} parent=1 // pred_fallthru
      _
    // Predicated region
    $region14: #{tpu_custom_call.1} parent=1 // pred_check
      _
    $region15: #{tpu_custom_call.1} parent=1 // pred_check_branch
      %39 = sbr.rel (0) target = $region17
    $region16: #{tpu_custom_call.1} parent=1 // pred_region
      _
    $region17: #{tpu_custom_call.1} parent=1 // pred_fallthru
      _
    // Predicated region
    $region18: #{tpu_custom_call.1} parent=1 // pred_check
      _
    $region19: #{tpu_custom_call.1} parent=1 // pred_check_branch
      %41 = sbr.rel (0) target = $region21
    $region20: #{tpu_custom_call.1} parent=1 // pred_region
      %42 = dma.done [#allocation3], 3072
    $region21: #{tpu_custom_call.1} parent=1 // pred_fallthru
      _
    // Predicated region
    $region22: #{tpu_custom_call.1} parent=1 // pred_check
      _
    $region23: #{tpu_custom_call.1} parent=1 // pred_check_branch
      %44 = sbr.rel (0) target = $region25
    $region24: #{tpu_custom_call.1} parent=1 // pred_region
      %45 = dma.done [#allocation6], 1536
    $region25: #{tpu_custom_call.1} parent=1 // pred_fallthru
      _
    %v46 = vld [vmem:[#allocation5] sm:$0xff]
    %v47 = vld [vmem:[#allocation5 + $0x8] sm:$0xff]
    %v48 = vld [vmem:[#allocation5 + $0x10] sm:$0xff]
    %v49 = vld [vmem:[#allocation5 + $0x18] sm:$0xff]
    %s50 = scalar_lea.vmem [#allocation5], 32
    %v51 = vld [vmem:[%s50] sm:$0xff]
    %v52 = vld [vmem:[%s50 + $0x8] sm:$0xff]
    %v53 = vld [vmem:[%s50 + $0x10] sm:$0xff]
    %v54 = vld [vmem:[%s50 + $0x18] sm:$0xff]
    %s55 = scalar_lea.vmem [#allocation5], 64
    %v56 = vld [vmem:[%s55] sm:$0xff]
    %v57 = vld [vmem:[%s55 + $0x8] sm:$0xff]
    %v58 = vld [vmem:[%s55 + $0x10] sm:$0xff]
    %v59 = vld [vmem:[%s55 + $0x18] sm:$0xff]
    %v60 = vld [vmem:[%s3] sm:$0x1]
    %v61 = vld [vmem:[#allocation2] sm:$0xff]
    %s62 = scalar_lea.vmem [#allocation2], 8
    %v63 = vld [vmem:[%s62] sm:$0xff]
    %s64 = scalar_lea.vmem [#allocation2], 16
    %v65 = vld [vmem:[%s64] sm:$0xff]
    %vm66 = vcmask 261120
    %v68 = vsel %vm66, 0.0, 0
    %70 = vmatprep.subr.mxu0 0.0
    %71 = vmatpush1.msra.mxu0 %v46
    %72 = vmatprep.subr.mxu0 0.0
    %73 = vmatpush1.msra.mxu0 %v47
    %74 = vmatprep.subr.mxu0 0.0
    %75 = vmatpush1.msra.mxu0 %v48
    %76 = vmatprep.subr.mxu0 0.0
    %77 = vmatpush1.msra.mxu0 %v49
    %78 = vmatprep.subr.mxu0 0.0
    %79 = vmatpush1.msra.mxu0 0.0
    %80 = vmatprep.subr.mxu0 0.0
    %81 = vmatpush1.msra.mxu0 0.0
    %82 = vmatprep.subr.mxu0 0.0
    %83 = vmatpush1.msra.mxu0 0.0
    %84 = vmatprep.subr.mxu0 0.0
    %85 = vmatpush1.msra.mxu0 0.0
    %86 = vmatprep.subr.mxu0 0.0
    %87 = vmatpush1.msra.mxu0 0.0
    %88 = vmatprep.subr.mxu0 0.0
    %89 = vmatpush1.msra.mxu0 0.0
    %90 = vmatprep.subr.mxu0 0.0
    %91 = vmatpush1.msra.mxu0 0.0
    %92 = vmatprep.subr.mxu0 0.0
    %93 = vmatpush1.msra.mxu0 0.0
    %94 = vmatprep.subr.mxu0 0.0
    %95 = vmatpush1.msra.mxu0 0.0
    %96 = vmatprep.subr.mxu0 0.0
    %97 = vmatpush1.msra.mxu0 0.0
    %98 = vmatprep.subr.mxu0 0.0
    %99 = vmatpush1.msra.mxu0 0.0
    %100 = vmatprep.subr.mxu0 0.0
    %101 = vmatpush1.msra.mxu0 0.0
    %102 = vmatprep.subr.mxu0 0.0
    %103 = vmatpush1.msra.mxu0 0.0
    %104 = vmatprep.subr.mxu0 0.0
    %105 = vmatpush1.msra.mxu0 0.0
    %106 = vmatprep.subr.mxu0 0.0
    %107 = vmatpush1.msra.mxu0 0.0
    %108 = vmatprep.subr.mxu0 0.0
    %109 = vmatpush1.msra.mxu0 0.0
    %110 = vmatprep.subr.mxu0 0.0
    %111 = vmatpush1.msra.mxu0 0.0
    %112 = vmatprep.subr.mxu0 0.0
    %113 = vmatpush1.msra.mxu0 0.0
    %114 = vmatprep.subr.mxu0 0.0
    %115 = vmatpush1.msra.mxu0 0.0
    %116 = vmatprep.subr.mxu0 0.0
    %117 = vmatpush1.msra.mxu0 0.0
    %118 = vmatprep.subr.mxu0 0.0
    %119 = vmatpush1.msra.mxu0 0.0
    %120 = vmatprep.subr.mxu0 0.0
    %121 = vmatpush1.msra.mxu0 0.0
    %122 = vmatprep.subr.mxu0 0.0
    %123 = vmatpush1.msra.mxu0 0.0
    %124 = vmatprep.subr.mxu0 0.0
    %125 = vmatpush1.msra.mxu0 0.0
    %126 = vmatprep.subr.mxu0 0.0
    %127 = vmatpush1.msra.mxu0 0.0
    %128 = vmatprep.subr.mxu0 0.0
    %129 = vmatpush1.msra.mxu0 0.0
    %130 = vmatprep.subr.mxu0 0.0
    %131 = vmatpush1.msra.mxu0 0.0
    %132 = vmatprep.subr.mxu0 0.0
    %133 = vmatpush1.msra.mxu0 0.0
    %134 = vmatprep.mubr.f32.mxu0 0.0
    %135 = vmatmul.mubr.f32.gmra.mrb[0].mxu0 %v68
    %v136 = vpop.f32.mrb[0].mxu0
    %v137 = vadd.f32 0.0, %v136
    %v138 = vpop.f32.mrb[0].mxu0
    %139 = vdwg.mxu0
    %v140 = vadd.f32 %v61, %v137
    %v141 = vxor.u32 %v140, 2147483648
    %v142 = vmul.f32 %v141, 1.442695
    %v143 = vpow.pop %v142
    %v144 = vadd.f32 %v143, 1.0
    %v145 = vrcp.pop %v144
    %v146 = vmul.f32 1.0, %v145
    %147 = vmatprep.subr.mxu0 0.0
    %148 = vmatpush1.msra.mxu0 %v51
    %149 = vmatprep.subr.mxu0 0.0
    %150 = vmatpush1.msra.mxu0 %v52
    %151 = vmatprep.subr.mxu0 0.0
    %152 = vmatpush1.msra.mxu0 %v53
    %153 = vmatprep.subr.mxu0 0.0
    %154 = vmatpush1.msra.mxu0 %v54
    %155 = vmatprep.subr.mxu0 0.0
    %156 = vmatpush1.msra.mxu0 0.0
    %157 = vmatprep.subr.mxu0 0.0
    %158 = vmatpush1.msra.mxu0 0.0
    %159 = vmatprep.subr.mxu0 0.0
    %160 = vmatpush1.msra.mxu0 0.0
    %161 = vmatprep.subr.mxu0 0.0
    %162 = vmatpush1.msra.mxu0 0.0
    %163 = vmatprep.subr.mxu0 0.0
    %164 = vmatpush1.msra.mxu0 0.0
    %165 = vmatprep.subr.mxu0 0.0
    %166 = vmatpush1.msra.mxu0 0.0
    %167 = vmatprep.subr.mxu0 0.0
    %168 = vmatpush1.msra.mxu0 0.0
    %169 = vmatprep.subr.mxu0 0.0
    %170 = vmatpush1.msra.mxu0 0.0
    %171 = vmatprep.subr.mxu0 0.0
    %172 = vmatpush1.msra.mxu0 0.0
    %173 = vmatprep.subr.mxu0 0.0
    %174 = vmatpush1.msra.mxu0 0.0
    %175 = vmatprep.subr.mxu0 0.0
    %176 = vmatpush1.msra.mxu0 0.0
    %177 = vmatprep.subr.mxu0 0.0
    %178 = vmatpush1.msra.mxu0 0.0
    %179 = vmatprep.subr.mxu0 0.0
    %180 = vmatpush1.msra.mxu0 0.0
    %181 = vmatprep.subr.mxu0 0.0
    %182 = vmatpush1.msra.mxu0 0.0
    %183 = vmatprep.subr.mxu0 0.0
    %184 = vmatpush1.msra.mxu0 0.0
    %185 = vmatprep.subr.mxu0 0.0
    %186 = vmatpush1.msra.mxu0 0.0
    %187 = vmatprep.subr.mxu0 0.0
    %188 = vmatpush1.msra.mxu0 0.0
    %189 = vmatprep.subr.mxu0 0.0
    %190 = vmatpush1.msra.mxu0 0.0
    %191 = vmatprep.subr.mxu0 0.0
    %192 = vmatpush1.msra.mxu0 0.0
    %193 = vmatprep.subr.mxu0 0.0
    %194 = vmatpush1.msra.mxu0 0.0
    %195 = vmatprep.subr.mxu0 0.0
    %196 = vmatpush1.msra.mxu0 0.0
    %197 = vmatprep.subr.mxu0 0.0
    %198 = vmatpush1.msra.mxu0 0.0
    %199 = vmatprep.subr.mxu0 0.0
    %200 = vmatpush1.msra.mxu0 0.0
    %201 = vmatprep.subr.mxu0 0.0
    %202 = vmatpush1.msra.mxu0 0.0
    %203 = vmatprep.subr.mxu0 0.0
    %204 = vmatpush1.msra.mxu0 0.0
    %205 = vmatprep.subr.mxu0 0.0
    %206 = vmatpush1.msra.mxu0 0.0
    %207 = vmatprep.subr.mxu0 0.0
    %208 = vmatpush1.msra.mxu0 0.0
    %209 = vmatprep.subr.mxu0 0.0
    %210 = vmatpush1.msra.mxu0 0.0
    %211 = vmatprep.mubr.f32.mxu0 0.0
    %212 = vmatmul.mubr.f32.gmra.mrb[0].mxu0 %v68
    %v213 = vpop.f32.mrb[0].mxu0
    %v214 = vadd.f32 0.0, %v213
    %v215 = vpop.f32.mrb[0].mxu0
    %216 = vdwg.mxu0
    %v217 = vadd.f32 %v63, %v214
    %v218 = vxor.u32 %v217, 2147483648
    %v219 = vmul.f32 %v218, 1.442695
    %v220 = vpow.pop %v219
    %v221 = vadd.f32 %v220, 1.0
    %v222 = vrcp.pop %v221
    %v223 = vmul.f32 1.0, %v222
    %v225 = vlaneseq
    %v226 = vshrl.u32 %v225, 7
    %v227 = vsub.s32 0, %v226
    %v228 = vrot.slane %v60, %v227
    %230 = vmatprep.subr.mxu0 0.0
    %231 = vmatpush1.msra.mxu0 %v56
    %232 = vmatprep.subr.mxu0 0.0
    %233 = vmatpush1.msra.mxu0 %v57
    %234 = vmatprep.subr.mxu0 0.0
    %235 = vmatpush1.msra.mxu0 %v58
    %236 = vmatprep.subr.mxu0 0.0
    %237 = vmatpush1.msra.mxu0 %v59
    %238 = vmatprep.subr.mxu0 0.0
    %239 = vmatpush1.msra.mxu0 0.0
    %240 = vmatprep.subr.mxu0 0.0
    %241 = vmatpush1.msra.mxu0 0.0
    %242 = vmatprep.subr.mxu0 0.0
    %243 = vmatpush1.msra.mxu0 0.0
    %244 = vmatprep.subr.mxu0 0.0
    %245 = vmatpush1.msra.mxu0 0.0
    %246 = vmatprep.subr.mxu0 0.0
    %247 = vmatpush1.msra.mxu0 0.0
    %248 = vmatprep.subr.mxu0 0.0
    %249 = vmatpush1.msra.mxu0 0.0
    %250 = vmatprep.subr.mxu0 0.0
    %251 = vmatpush1.msra.mxu0 0.0
    %252 = vmatprep.subr.mxu0 0.0
    %253 = vmatpush1.msra.mxu0 0.0
    %254 = vmatprep.subr.mxu0 0.0
    %255 = vmatpush1.msra.mxu0 0.0
    %256 = vmatprep.subr.mxu0 0.0
    %257 = vmatpush1.msra.mxu0 0.0
    %258 = vmatprep.subr.mxu0 0.0
    %259 = vmatpush1.msra.mxu0 0.0
    %260 = vmatprep.subr.mxu0 0.0
    %261 = vmatpush1.msra.mxu0 0.0
    %262 = vmatprep.subr.mxu0 0.0
    %263 = vmatpush1.msra.mxu0 0.0
    %264 = vmatprep.subr.mxu0 0.0
    %265 = vmatpush1.msra.mxu0 0.0
    %266 = vmatprep.subr.mxu0 0.0
    %267 = vmatpush1.msra.mxu0 0.0
    %268 = vmatprep.subr.mxu0 0.0
    %269 = vmatpush1.msra.mxu0 0.0
    %270 = vmatprep.subr.mxu0 0.0
    %271 = vmatpush1.msra.mxu0 0.0
    %272 = vmatprep.subr.mxu0 0.0
    %273 = vmatpush1.msra.mxu0 0.0
    %274 = vmatprep.subr.mxu0 0.0
    %275 = vmatpush1.msra.mxu0 0.0
    %276 = vmatprep.subr.mxu0 0.0
    %277 = vmatpush1.msra.mxu0 0.0
    %278 = vmatprep.subr.mxu0 0.0
    %279 = vmatpush1.msra.mxu0 0.0
    %280 = vmatprep.subr.mxu0 0.0
    %281 = vmatpush1.msra.mxu0 0.0
    %282 = vmatprep.subr.mxu0 0.0
    %283 = vmatpush1.msra.mxu0 0.0
    %284 = vmatprep.subr.mxu0 0.0
    %285 = vmatpush1.msra.mxu0 0.0
    %286 = vmatprep.subr.mxu0 0.0
    %287 = vmatpush1.msra.mxu0 0.0
    %288 = vmatprep.subr.mxu0 0.0
    %289 = vmatpush1.msra.mxu0 0.0
    %290 = vmatprep.subr.mxu0 0.0
    %291 = vmatpush1.msra.mxu0 0.0
    %292 = vmatprep.subr.mxu0 0.0
    %293 = vmatpush1.msra.mxu0 0.0
    %294 = vmatprep.mubr.f32.mxu0 0.0
    %295 = vmatmul.mubr.f32.gmra.mrb[0].mxu0 %v68
    %v296 = vpop.f32.mrb[0].mxu0
    %v297 = vadd.f32 %v228, %v296
    %v298 = vpop.f32.mrb[0].mxu0
    %299 = vdwg.mxu0
    %v300 = vmul.f32 %v146, %v297
    %v301 = vadd.f32 %v65, %v300
    %v302 = vtanh.pop %v301
    %v303 = vsub.f32 1.0, %v223
    %v304 = vmul.f32 %v303, %v302
    %v305 = vmul.f32 %v223, 0.0
    %v306 = vadd.f32 %v304, %v305
    %v307 = vld [vmem:[%s1] sm:$0xff]
    %309 = vset.pattern.permute.xlu0 0
    %310 = vperm.xlu0 %309, %v307
    %v311 = vpop.permute.xlu0 %310
    %v313 = vmul.f32 %v311, %v306
    %v314 = vadd.f32 %v313, 0.0
    %s315 = scalar_lea.vmem [#allocation2], 24
    %v316 = vld [vmem:[%s315] sm:$0xff]
    %s317 = scalar_lea.vmem [#allocation2], 32
    %v318 = vld [vmem:[%s317] sm:$0xff]
    %s319 = scalar_lea.vmem [#allocation2], 40
    %v320 = vld [vmem:[%s319] sm:$0xff]
    %v322 = vsel %vm66, %v314, 0
    %324 = vmatprep.subr.mxu0 0.0
    %325 = vmatpush1.msra.mxu0 %v46
    %326 = vmatprep.subr.mxu0 0.0
    %327 = vmatpush1.msra.mxu0 %v47
    %328 = vmatprep.subr.mxu0 0.0
    %329 = vmatpush1.msra.mxu0 %v48
    %330 = vmatprep.subr.mxu0 0.0
    %331 = vmatpush1.msra.mxu0 %v49
    %332 = vmatprep.subr.mxu0 0.0
    %333 = vmatpush1.msra.mxu0 0.0
    %334 = vmatprep.subr.mxu0 0.0
    %335 = vmatpush1.msra.mxu0 0.0
    %336 = vmatprep.subr.mxu0 0.0
    %337 = vmatpush1.msra.mxu0 0.0
    %338 = vmatprep.subr.mxu0 0.0
    %339 = vmatpush1.msra.mxu0 0.0
    %340 = vmatprep.subr.mxu0 0.0
    %341 = vmatpush1.msra.mxu0 0.0
    %342 = vmatprep.subr.mxu0 0.0
    %343 = vmatpush1.msra.mxu0 0.0
    %344 = vmatprep.subr.mxu0 0.0
    %345 = vmatpush1.msra.mxu0 0.0
    %346 = vmatprep.subr.mxu0 0.0
    %347 = vmatpush1.msra.mxu0 0.0
    %348 = vmatprep.subr.mxu0 0.0
    %349 = vmatpush1.msra.mxu0 0.0
    %350 = vmatprep.subr.mxu0 0.0
    %351 = vmatpush1.msra.mxu0 0.0
    %352 = vmatprep.subr.mxu0 0.0
    %353 = vmatpush1.msra.mxu0 0.0
    %354 = vmatprep.subr.mxu0 0.0
    %355 = vmatpush1.msra.mxu0 0.0
    %356 = vmatprep.subr.mxu0 0.0
    %357 = vmatpush1.msra.mxu0 0.0
    %358 = vmatprep.subr.mxu0 0.0
    %359 = vmatpush1.msra.mxu0 0.0
    %360 = vmatprep.subr.mxu0 0.0
    %361 = vmatpush1.msra.mxu0 0.0
    %362 = vmatprep.subr.mxu0 0.0
    %363 = vmatpush1.msra.mxu0 0.0
    %364 = vmatprep.subr.mxu0 0.0
    %365 = vmatpush1.msra.mxu0 0.0
    %366 = vmatprep.subr.mxu0 0.0
    %367 = vmatpush1.msra.mxu0 0.0
    %368 = vmatprep.subr.mxu0 0.0
    %369 = vmatpush1.msra.mxu0 0.0
    %370 = vmatprep.subr.mxu0 0.0
    %371 = vmatpush1.msra.mxu0 0.0
    %372 = vmatprep.subr.mxu0 0.0
    %373 = vmatpush1.msra.mxu0 0.0
    %374 = vmatprep.subr.mxu0 0.0
    %375 = vmatpush1.msra.mxu0 0.0
    %376 = vmatprep.subr.mxu0 0.0
    %377 = vmatpush1.msra.mxu0 0.0
    %378 = vmatprep.subr.mxu0 0.0
    %379 = vmatpush1.msra.mxu0 0.0
    %380 = vmatprep.subr.mxu0 0.0
    %381 = vmatpush1.msra.mxu0 0.0
    %382 = vmatprep.subr.mxu0 0.0
    %383 = vmatpush1.msra.mxu0 0.0
    %384 = vmatprep.subr.mxu0 0.0
    %385 = vmatpush1.msra.mxu0 0.0
    %386 = vmatprep.subr.mxu0 0.0
    %387 = vmatpush1.msra.mxu0 0.0
    %388 = vmatprep.mubr.f32.mxu0 0.0
    %389 = vmatmul.mubr.f32.gmra.mrb[0].mxu0 %v322
    %v390 = vpop.f32.mrb[0].mxu0
    %v391 = vadd.f32 0.0, %v390
    %v392 = vpop.f32.mrb[0].mxu0
    %393 = vdwg.mxu0
    %v394 = vadd.f32 %v316, %v391
    %v395 = vxor.u32 %v394, 2147483648
    %v396 = vmul.f32 %v395, 1.442695
    %v397 = vpow.pop %v396
    %v398 = vadd.f32 %v397, 1.0
    %v399 = vrcp.pop %v398
    %v400 = vmul.f32 1.0, %v399
    %401 = vmatprep.subr.mxu0 0.0
    %402 = vmatpush1.msra.mxu0 %v51
    %403 = vmatprep.subr.mxu0 0.0
    %404 = vmatpush1.msra.mxu0 %v52
    %405 = vmatprep.subr.mxu0 0.0
    %406 = vmatpush1.msra.mxu0 %v53
    %407 = vmatprep.subr.mxu0 0.0
    %408 = vmatpush1.msra.mxu0 %v54
    %409 = vmatprep.subr.mxu0 0.0
    %410 = vmatpush1.msra.mxu0 0.0
    %411 = vmatprep.subr.mxu0 0.0
    %412 = vmatpush1.msra.mxu0 0.0
    %413 = vmatprep.subr.mxu0 0.0
    %414 = vmatpush1.msra.mxu0 0.0
    %415 = vmatprep.subr.mxu0 0.0
    %416 = vmatpush1.msra.mxu0 0.0
    %417 = vmatprep.subr.mxu0 0.0
    %418 = vmatpush1.msra.mxu0 0.0
    %419 = vmatprep.subr.mxu0 0.0
    %420 = vmatpush1.msra.mxu0 0.0
    %421 = vmatprep.subr.mxu0 0.0
    %422 = vmatpush1.msra.mxu0 0.0
    %423 = vmatprep.subr.mxu0 0.0
    %424 = vmatpush1.msra.mxu0 0.0
    %425 = vmatprep.subr.mxu0 0.0
    %426 = vmatpush1.msra.mxu0 0.0
    %427 = vmatprep.subr.mxu0 0.0
    %428 = vmatpush1.msra.mxu0 0.0
    %429 = vmatprep.subr.mxu0 0.0
    %430 = vmatpush1.msra.mxu0 0.0
    %431 = vmatprep.subr.mxu0 0.0
    %432 = vmatpush1.msra.mxu0 0.0
    %433 = vmatprep.subr.mxu0 0.0
    %434 = vmatpush1.msra.mxu0 0.0
    %435 = vmatprep.subr.mxu0 0.0
    %436 = vmatpush1.msra.mxu0 0.0
    %437 = vmatprep.subr.mxu0 0.0
    %438 = vmatpush1.msra.mxu0 0.0
    %439 = vmatprep.subr.mxu0 0.0
    %440 = vmatpush1.msra.mxu0 0.0
    %441 = vmatprep.subr.mxu0 0.0
    %442 = vmatpush1.msra.mxu0 0.0
    %443 = vmatprep.subr.mxu0 0.0
    %444 = vmatpush1.msra.mxu0 0.0
    %445 = vmatprep.subr.mxu0 0.0
    %446 = vmatpush1.msra.mxu0 0.0
    %447 = vmatprep.subr.mxu0 0.0
    %448 = vmatpush1.msra.mxu0 0.0
    %449 = vmatprep.subr.mxu0 0.0
    %450 = vmatpush1.msra.mxu0 0.0
    %451 = vmatprep.subr.mxu0 0.0
    %452 = vmatpush1.msra.mxu0 0.0
    %453 = vmatprep.subr.mxu0 0.0
    %454 = vmatpush1.msra.mxu0 0.0
    %455 = vmatprep.subr.mxu0 0.0
    %456 = vmatpush1.msra.mxu0 0.0
    %457 = vmatprep.subr.mxu0 0.0
    %458 = vmatpush1.msra.mxu0 0.0
    %459 = vmatprep.subr.mxu0 0.0
    %460 = vmatpush1.msra.mxu0 0.0
    %461 = vmatprep.subr.mxu0 0.0
    %462 = vmatpush1.msra.mxu0 0.0
    %463 = vmatprep.subr.mxu0 0.0
    %464 = vmatpush1.msra.mxu0 0.0
    %465 = vmatprep.mubr.f32.mxu0 0.0
    %466 = vmatmul.mubr.f32.gmra.mrb[0].mxu0 %v322
    %v467 = vpop.f32.mrb[0].mxu0
    %v468 = vadd.f32 0.0, %v467
    %v469 = vpop.f32.mrb[0].mxu0
    %470 = vdwg.mxu0
    %v471 = vadd.f32 %v318, %v468
    %v472 = vxor.u32 %v471, 2147483648
    %v473 = vmul.f32 %v472, 1.442695
    %v474 = vpow.pop %v473
    %v475 = vadd.f32 %v474, 1.0
    %v476 = vrcp.pop %v475
    %v477 = vmul.f32 1.0, %v476
    %478 = vmatprep.subr.mxu0 0.0
    %479 = vmatpush1.msra.mxu0 %v56
    %480 = vmatprep.subr.mxu0 0.0
    %481 = vmatpush1.msra.mxu0 %v57
    %482 = vmatprep.subr.mxu0 0.0
    %483 = vmatpush1.msra.mxu0 %v58
    %484 = vmatprep.subr.mxu0 0.0
    %485 = vmatpush1.msra.mxu0 %v59
    %486 = vmatprep.subr.mxu0 0.0
    %487 = vmatpush1.msra.mxu0 0.0
    %488 = vmatprep.subr.mxu0 0.0
    %489 = vmatpush1.msra.mxu0 0.0
    %490 = vmatprep.subr.mxu0 0.0
    %491 = vmatpush1.msra.mxu0 0.0
    %492 = vmatprep.subr.mxu0 0.0
    %493 = vmatpush1.msra.mxu0 0.0
    %494 = vmatprep.subr.mxu0 0.0
    %495 = vmatpush1.msra.mxu0 0.0
    %496 = vmatprep.subr.mxu0 0.0
    %497 = vmatpush1.msra.mxu0 0.0
    %498 = vmatprep.subr.mxu0 0.0
    %499 = vmatpush1.msra.mxu0 0.0
    %500 = vmatprep.subr.mxu0 0.0
    %501 = vmatpush1.msra.mxu0 0.0
    %502 = vmatprep.subr.mxu0 0.0
    %503 = vmatpush1.msra.mxu0 0.0
    %504 = vmatprep.subr.mxu0 0.0
    %505 = vmatpush1.msra.mxu0 0.0
    %506 = vmatprep.subr.mxu0 0.0
    %507 = vmatpush1.msra.mxu0 0.0
    %508 = vmatprep.subr.mxu0 0.0
    %509 = vmatpush1.msra.mxu0 0.0
    %510 = vmatprep.subr.mxu0 0.0
    %511 = vmatpush1.msra.mxu0 0.0
    %512 = vmatprep.subr.mxu0 0.0
    %513 = vmatpush1.msra.mxu0 0.0
    %514 = vmatprep.subr.mxu0 0.0
    %515 = vmatpush1.msra.mxu0 0.0
    %516 = vmatprep.subr.mxu0 0.0
    %517 = vmatpush1.msra.mxu0 0.0
    %518 = vmatprep.subr.mxu0 0.0
    %519 = vmatpush1.msra.mxu0 0.0
    %520 = vmatprep.subr.mxu0 0.0
    %521 = vmatpush1.msra.mxu0 0.0
    %522 = vmatprep.subr.mxu0 0.0
    %523 = vmatpush1.msra.mxu0 0.0
    %524 = vmatprep.subr.mxu0 0.0
    %525 = vmatpush1.msra.mxu0 0.0
    %526 = vmatprep.subr.mxu0 0.0
    %527 = vmatpush1.msra.mxu0 0.0
    %528 = vmatprep.subr.mxu0 0.0
    %529 = vmatpush1.msra.mxu0 0.0
    %530 = vmatprep.subr.mxu0 0.0
    %531 = vmatpush1.msra.mxu0 0.0
    %532 = vmatprep.subr.mxu0 0.0
    %533 = vmatpush1.msra.mxu0 0.0
    %534 = vmatprep.subr.mxu0 0.0
    %535 = vmatpush1.msra.mxu0 0.0
    %536 = vmatprep.subr.mxu0 0.0
    %537 = vmatpush1.msra.mxu0 0.0
    %538 = vmatprep.subr.mxu0 0.0
    %539 = vmatpush1.msra.mxu0 0.0
    %540 = vmatprep.subr.mxu0 0.0
    %541 = vmatpush1.msra.mxu0 0.0
    %542 = vmatprep.mubr.f32.mxu0 0.0
    %543 = vmatmul.mubr.f32.gmra.mrb[0].mxu0 %v322
    %v544 = vpop.f32.mrb[0].mxu0
    %v545 = vadd.f32 %v228, %v544
    %v546 = vpop.f32.mrb[0].mxu0
    %547 = vdwg.mxu0
    %v548 = vmul.f32 %v400, %v545
    %v549 = vadd.f32 %v320, %v548
    %v550 = vtanh.pop %v549
    %v551 = vsub.f32 1.0, %v477
    %v552 = vmul.f32 %v551, %v550
    %v553 = vmul.f32 %v477, %v314
    %v554 = vadd.f32 %v552, %v553
    %s555 = scalar_lea.vmem %s1, 8
    %v556 = vld [vmem:[%s555] sm:$0xff]
    %v557 = vsub.f32 %v554, %v314
    %559 = vset.pattern.permute.xlu0 0
    %560 = vperm.xlu0 %559, %v556
    %v561 = vpop.permute.xlu0 %560
    %v563 = vmul.f32 %v561, %v557
    %v564 = vadd.f32 %v314, %v563
    %s565 = scalar_lea.vmem [#allocation2], 48
    %v566 = vld [vmem:[%s565] sm:$0xff]
    %s567 = scalar_lea.vmem [#allocation2], 56
    %v568 = vld [vmem:[%s567] sm:$0xff]
    %s569 = scalar_lea.vmem [#allocation2], 64
    %v570 = vld [vmem:[%s569] sm:$0xff]
    %v572 = vsel %vm66, %v564, 0
    %574 = vmatprep.subr.mxu0 0.0
    %575 = vmatpush1.msra.mxu0 %v46
    %576 = vmatprep.subr.mxu0 0.0
    %577 = vmatpush1.msra.mxu0 %v47
    %578 = vmatprep.subr.mxu0 0.0
    %579 = vmatpush1.msra.mxu0 %v48
    %580 = vmatprep.subr.mxu0 0.0
    %581 = vmatpush1.msra.mxu0 %v49
    %582 = vmatprep.subr.mxu0 0.0
    %583 = vmatpush1.msra.mxu0 0.0
    %584 = vmatprep.subr.mxu0 0.0
    %585 = vmatpush1.msra.mxu0 0.0
    %586 = vmatprep.subr.mxu0 0.0
    %587 = vmatpush1.msra.mxu0 0.0
    %588 = vmatprep.subr.mxu0 0.0
    %589 = vmatpush1.msra.mxu0 0.0
    %590 = vmatprep.subr.mxu0 0.0
    %591 = vmatpush1.msra.mxu0 0.0
    %592 = vmatprep.subr.mxu0 0.0
    %593 = vmatpush1.msra.mxu0 0.0
    %594 = vmatprep.subr.mxu0 0.0
    %595 = vmatpush1.msra.mxu0 0.0
    %596 = vmatprep.subr.mxu0 0.0
    %597 = vmatpush1.msra.mxu0 0.0
    %598 = vmatprep.subr.mxu0 0.0
    %599 = vmatpush1.msra.mxu0 0.0
    %600 = vmatprep.subr.mxu0 0.0
    %601 = vmatpush1.msra.mxu0 0.0
    %602 = vmatprep.subr.mxu0 0.0
    %603 = vmatpush1.msra.mxu0 0.0
    %604 = vmatprep.subr.mxu0 0.0
    %605 = vmatpush1.msra.mxu0 0.0
    %606 = vmatprep.subr.mxu0 0.0
    %607 = vmatpush1.msra.mxu0 0.0
    %608 = vmatprep.subr.mxu0 0.0
    %609 = vmatpush1.msra.mxu0 0.0
    %610 = vmatprep.subr.mxu0 0.0
    %611 = vmatpush1.msra.mxu0 0.0
    %612 = vmatprep.subr.mxu0 0.0
    %613 = vmatpush1.msra.mxu0 0.0
    %614 = vmatprep.subr.mxu0 0.0
    %615 = vmatpush1.msra.mxu0 0.0
    %616 = vmatprep.subr.mxu0 0.0
    %617 = vmatpush1.msra.mxu0 0.0
    %618 = vmatprep.subr.mxu0 0.0
    %619 = vmatpush1.msra.mxu0 0.0
    %620 = vmatprep.subr.mxu0 0.0
    %621 = vmatpush1.msra.mxu0 0.0
    %622 = vmatprep.subr.mxu0 0.0
    %623 = vmatpush1.msra.mxu0 0.0
    %624 = vmatprep.subr.mxu0 0.0
    %625 = vmatpush1.msra.mxu0 0.0
    %626 = vmatprep.subr.mxu0 0.0
    %627 = vmatpush1.msra.mxu0 0.0
    %628 = vmatprep.subr.mxu0 0.0
    %629 = vmatpush1.msra.mxu0 0.0
    %630 = vmatprep.subr.mxu0 0.0
    %631 = vmatpush1.msra.mxu0 0.0
    %632 = vmatprep.subr.mxu0 0.0
    %633 = vmatpush1.msra.mxu0 0.0
    %634 = vmatprep.subr.mxu0 0.0
    %635 = vmatpush1.msra.mxu0 0.0
    %636 = vmatprep.subr.mxu0 0.0
    %637 = vmatpush1.msra.mxu0 0.0
    %638 = vmatprep.mubr.f32.mxu0 0.0
    %639 = vmatmul.mubr.f32.gmra.mrb[0].mxu0 %v572
    %v640 = vpop.f32.mrb[0].mxu0
    %v641 = vadd.f32 0.0, %v640
    %v642 = vpop.f32.mrb[0].mxu0
    %643 = vdwg.mxu0
    %v644 = vadd.f32 %v566, %v641
    %v645 = vxor.u32 %v644, 2147483648
    %v646 = vmul.f32 %v645, 1.442695
    %v647 = vpow.pop %v646
    %v648 = vadd.f32 %v647, 1.0
    %v649 = vrcp.pop %v648
    %v650 = vmul.f32 1.0, %v649
    %651 = vmatprep.subr.mxu0 0.0
    %652 = vmatpush1.msra.mxu0 %v51
    %653 = vmatprep.subr.mxu0 0.0
    %654 = vmatpush1.msra.mxu0 %v52
    %655 = vmatprep.subr.mxu0 0.0
    %656 = vmatpush1.msra.mxu0 %v53
    %657 = vmatprep.subr.mxu0 0.0
    %658 = vmatpush1.msra.mxu0 %v54
    %659 = vmatprep.subr.mxu0 0.0
    %660 = vmatpush1.msra.mxu0 0.0
    %661 = vmatprep.subr.mxu0 0.0
    %662 = vmatpush1.msra.mxu0 0.0
    %663 = vmatprep.subr.mxu0 0.0
    %664 = vmatpush1.msra.mxu0 0.0
    %665 = vmatprep.subr.mxu0 0.0
    %666 = vmatpush1.msra.mxu0 0.0
    %667 = vmatprep.subr.mxu0 0.0
    %668 = vmatpush1.msra.mxu0 0.0
    %669 = vmatprep.subr.mxu0 0.0
    %670 = vmatpush1.msra.mxu0 0.0
    %671 = vmatprep.subr.mxu0 0.0
    %672 = vmatpush1.msra.mxu0 0.0
    %673 = vmatprep.subr.mxu0 0.0
    %674 = vmatpush1.msra.mxu0 0.0
    %675 = vmatprep.subr.mxu0 0.0
    %676 = vmatpush1.msra.mxu0 0.0
    %677 = vmatprep.subr.mxu0 0.0
    %678 = vmatpush1.msra.mxu0 0.0
    %679 = vmatprep.subr.mxu0 0.0
    %680 = vmatpush1.msra.mxu0 0.0
    %681 = vmatprep.subr.mxu0 0.0
    %682 = vmatpush1.msra.mxu0 0.0
    %683 = vmatprep.subr.mxu0 0.0
    %684 = vmatpush1.msra.mxu0 0.0
    %685 = vmatprep.subr.mxu0 0.0
    %686 = vmatpush1.msra.mxu0 0.0
    %687 = vmatprep.subr.mxu0 0.0
    %688 = vmatpush1.msra.mxu0 0.0
    %689 = vmatprep.subr.mxu0 0.0
    %690 = vmatpush1.msra.mxu0 0.0
    %691 = vmatprep.subr.mxu0 0.0
    %692 = vmatpush1.msra.mxu0 0.0
    %693 = vmatprep.subr.mxu0 0.0
    %694 = vmatpush1.msra.mxu0 0.0
    %695 = vmatprep.subr.mxu0 0.0
    %696 = vmatpush1.msra.mxu0 0.0
    %697 = vmatprep.subr.mxu0 0.0
    %698 = vmatpush1.msra.mxu0 0.0
    %699 = vmatprep.subr.mxu0 0.0
    %700 = vmatpush1.msra.mxu0 0.0
    %701 = vmatprep.subr.mxu0 0.0
    %702 = vmatpush1.msra.mxu0 0.0
    %703 = vmatprep.subr.mxu0 0.0
    %704 = vmatpush1.msra.mxu0 0.0
    %705 = vmatprep.subr.mxu0 0.0
    %706 = vmatpush1.msra.mxu0 0.0
    %707 = vmatprep.subr.mxu0 0.0
    %708 = vmatpush1.msra.mxu0 0.0
    %709 = vmatprep.subr.mxu0 0.0
    %710 = vmatpush1.msra.mxu0 0.0
    %711 = vmatprep.subr.mxu0 0.0
    %712 = vmatpush1.msra.mxu0 0.0
    %713 = vmatprep.subr.mxu0 0.0
    %714 = vmatpush1.msra.mxu0 0.0
    %715 = vmatprep.mubr.f32.mxu0 0.0
    %716 = vmatmul.mubr.f32.gmra.mrb[0].mxu0 %v572
    %v717 = vpop.f32.mrb[0].mxu0
    %v718 = vadd.f32 0.0, %v717
    %v719 = vpop.f32.mrb[0].mxu0
    %720 = vdwg.mxu0
    %v721 = vadd.f32 %v568, %v718
    %v722 = vxor.u32 %v721, 2147483648
    %v723 = vmul.f32 %v722, 1.442695
    %v724 = vpow.pop %v723
    %v725 = vadd.f32 %v724, 1.0
    %v726 = vrcp.pop %v725
    %v727 = vmul.f32 1.0, %v726
    %728 = vmatprep.subr.mxu0 0.0
    %729 = vmatpush1.msra.mxu0 %v56
    %730 = vmatprep.subr.mxu0 0.0
    %731 = vmatpush1.msra.mxu0 %v57
    %732 = vmatprep.subr.mxu0 0.0
    %733 = vmatpush1.msra.mxu0 %v58
    %734 = vmatprep.subr.mxu0 0.0
    %735 = vmatpush1.msra.mxu0 %v59
    %736 = vmatprep.subr.mxu0 0.0
    %737 = vmatpush1.msra.mxu0 0.0
    %738 = vmatprep.subr.mxu0 0.0
    %739 = vmatpush1.msra.mxu0 0.0
    %740 = vmatprep.subr.mxu0 0.0
    %741 = vmatpush1.msra.mxu0 0.0
    %742 = vmatprep.subr.mxu0 0.0
    %743 = vmatpush1.msra.mxu0 0.0
    %744 = vmatprep.subr.mxu0 0.0
    %745 = vmatpush1.msra.mxu0 0.0
    %746 = vmatprep.subr.mxu0 0.0
    %747 = vmatpush1.msra.mxu0 0.0
    %748 = vmatprep.subr.mxu0 0.0
    %749 = vmatpush1.msra.mxu0 0.0
    %750 = vmatprep.subr.mxu0 0.0
    %751 = vmatpush1.msra.mxu0 0.0
    %752 = vmatprep.subr.mxu0 0.0
    %753 = vmatpush1.msra.mxu0 0.0
    %754 = vmatprep.subr.mxu0 0.0
    %755 = vmatpush1.msra.mxu0 0.0
    %756 = vmatprep.subr.mxu0 0.0
    %757 = vmatpush1.msra.mxu0 0.0
    %758 = vmatprep.subr.mxu0 0.0
    %759 = vmatpush1.msra.mxu0 0.0
    %760 = vmatprep.subr.mxu0 0.0
    %761 = vmatpush1.msra.mxu0 0.0
    %762 = vmatprep.subr.mxu0 0.0
    %763 = vmatpush1.msra.mxu0 0.0
    %764 = vmatprep.subr.mxu0 0.0
    %765 = vmatpush1.msra.mxu0 0.0
    %766 = vmatprep.subr.mxu0 0.0
    %767 = vmatpush1.msra.mxu0 0.0
    %768 = vmatprep.subr.mxu0 0.0
    %769 = vmatpush1.msra.mxu0 0.0
    %770 = vmatprep.subr.mxu0 0.0
    %771 = vmatpush1.msra.mxu0 0.0
    %772 = vmatprep.subr.mxu0 0.0
    %773 = vmatpush1.msra.mxu0 0.0
    %774 = vmatprep.subr.mxu0 0.0
    %775 = vmatpush1.msra.mxu0 0.0
    %776 = vmatprep.subr.mxu0 0.0
    %777 = vmatpush1.msra.mxu0 0.0
    %778 = vmatprep.subr.mxu0 0.0
    %779 = vmatpush1.msra.mxu0 0.0
    %780 = vmatprep.subr.mxu0 0.0
    %781 = vmatpush1.msra.mxu0 0.0
    %782 = vmatprep.subr.mxu0 0.0
    %783 = vmatpush1.msra.mxu0 0.0
    %784 = vmatprep.subr.mxu0 0.0
    %785 = vmatpush1.msra.mxu0 0.0
    %786 = vmatprep.subr.mxu0 0.0
    %787 = vmatpush1.msra.mxu0 0.0
    %788 = vmatprep.subr.mxu0 0.0
    %789 = vmatpush1.msra.mxu0 0.0
    %790 = vmatprep.subr.mxu0 0.0
    %791 = vmatpush1.msra.mxu0 0.0
    %792 = vmatprep.mubr.f32.mxu0 0.0
    %793 = vmatmul.mubr.f32.gmra.mrb[0].mxu0 %v572
    %v794 = vpop.f32.mrb[0].mxu0
    %v795 = vadd.f32 %v228, %v794
    %v796 = vpop.f32.mrb[0].mxu0
    %797 = vdwg.mxu0
    %v798 = vmul.f32 %v650, %v795
    %v799 = vadd.f32 %v570, %v798
    %v800 = vtanh.pop %v799
    %v801 = vsub.f32 1.0, %v727
    %v802 = vmul.f32 %v801, %v800
    %v803 = vmul.f32 %v727, %v564
    %v804 = vadd.f32 %v802, %v803
    %s805 = scalar_lea.vmem %s1, 16
    %v806 = vld [vmem:[%s805] sm:$0xff]
    %v807 = vsub.f32 %v804, %v564
    %809 = vset.pattern.permute.xlu0 0
    %810 = vperm.xlu0 %809, %v806
    %v811 = vpop.permute.xlu0 %810
    %v813 = vmul.f32 %v811, %v807
    %v814 = vadd.f32 %v564, %v813
    %s815 = scalar_lea.vmem [#allocation2], 72
    %v816 = vld [vmem:[%s815] sm:$0xff]
    %s817 = scalar_lea.vmem [#allocation2], 80
    %v818 = vld [vmem:[%s817] sm:$0xff]
    %s819 = scalar_lea.vmem [#allocation2], 88
    %v820 = vld [vmem:[%s819] sm:$0xff]
    %v822 = vsel %vm66, %v814, 0
    %824 = vmatprep.subr.mxu0 0.0
    %825 = vmatpush1.msra.mxu0 %v46
    %826 = vmatprep.subr.mxu0 0.0
    %827 = vmatpush1.msra.mxu0 %v47
    %828 = vmatprep.subr.mxu0 0.0
    %829 = vmatpush1.msra.mxu0 %v48
    %830 = vmatprep.subr.mxu0 0.0
    %831 = vmatpush1.msra.mxu0 %v49
    %832 = vmatprep.subr.mxu0 0.0
    %833 = vmatpush1.msra.mxu0 0.0
    %834 = vmatprep.subr.mxu0 0.0
    %835 = vmatpush1.msra.mxu0 0.0
    %836 = vmatprep.subr.mxu0 0.0
    %837 = vmatpush1.msra.mxu0 0.0
    %838 = vmatprep.subr.mxu0 0.0
    %839 = vmatpush1.msra.mxu0 0.0
    %840 = vmatprep.subr.mxu0 0.0
    %841 = vmatpush1.msra.mxu0 0.0
    %842 = vmatprep.subr.mxu0 0.0
    %843 = vmatpush1.msra.mxu0 0.0
    %844 = vmatprep.subr.mxu0 0.0
    %845 = vmatpush1.msra.mxu0 0.0
    %846 = vmatprep.subr.mxu0 0.0
    %847 = vmatpush1.msra.mxu0 0.0
    %848 = vmatprep.subr.mxu0 0.0
    %849 = vmatpush1.msra.mxu0 0.0
    %850 = vmatprep.subr.mxu0 0.0
    %851 = vmatpush1.msra.mxu0 0.0
    %852 = vmatprep.subr.mxu0 0.0
    %853 = vmatpush1.msra.mxu0 0.0
    %854 = vmatprep.subr.mxu0 0.0
    %855 = vmatpush1.msra.mxu0 0.0
    %856 = vmatprep.subr.mxu0 0.0
    %857 = vmatpush1.msra.mxu0 0.0
    %858 = vmatprep.subr.mxu0 0.0
    %859 = vmatpush1.msra.mxu0 0.0
    %860 = vmatprep.subr.mxu0 0.0
    %861 = vmatpush1.msra.mxu0 0.0
    %862 = vmatprep.subr.mxu0 0.0
    %863 = vmatpush1.msra.mxu0 0.0
    %864 = vmatprep.subr.mxu0 0.0
    %865 = vmatpush1.msra.mxu0 0.0
    %866 = vmatprep.subr.mxu0 0.0
    %867 = vmatpush1.msra.mxu0 0.0
    %868 = vmatprep.subr.mxu0 0.0
    %869 = vmatpush1.msra.mxu0 0.0
    %870 = vmatprep.subr.mxu0 0.0
    %871 = vmatpush1.msra.mxu0 0.0
    %872 = vmatprep.subr.mxu0 0.0
    %873 = vmatpush1.msra.mxu0 0.0
    %874 = vmatprep.subr.mxu0 0.0
    %875 = vmatpush1.msra.mxu0 0.0
    %876 = vmatprep.subr.mxu0 0.0
    %877 = vmatpush1.msra.mxu0 0.0
    %878 = vmatprep.subr.mxu0 0.0
    %879 = vmatpush1.msra.mxu0 0.0
    %880 = vmatprep.subr.mxu0 0.0
    %881 = vmatpush1.msra.mxu0 0.0
    %882 = vmatprep.subr.mxu0 0.0
    %883 = vmatpush1.msra.mxu0 0.0
    %884 = vmatprep.subr.mxu0 0.0
    %885 = vmatpush1.msra.mxu0 0.0
    %886 = vmatprep.subr.mxu0 0.0
    %887 = vmatpush1.msra.mxu0 0.0
    %888 = vmatprep.mubr.f32.mxu0 0.0
    %889 = vmatmul.mubr.f32.gmra.mrb[0].mxu0 %v822
    %v890 = vpop.f32.mrb[0].mxu0
    %v891 = vadd.f32 0.0, %v890
    %v892 = vpop.f32.mrb[0].mxu0
    %893 = vdwg.mxu0
    %v894 = vadd.f32 %v816, %v891
    %v895 = vxor.u32 %v894, 2147483648
    %v896 = vmul.f32 %v895, 1.442695
    %v897 = vpow.pop %v896
    %v898 = vadd.f32 %v897, 1.0
    %v899 = vrcp.pop %v898
    %v900 = vmul.f32 1.0, %v899
    %901 = vmatprep.subr.mxu0 0.0
    %902 = vmatpush1.msra.mxu0 %v51
    %903 = vmatprep.subr.mxu0 0.0
    %904 = vmatpush1.msra.mxu0 %v52
    %905 = vmatprep.subr.mxu0 0.0
    %906 = vmatpush1.msra.mxu0 %v53
    %907 = vmatprep.subr.mxu0 0.0
    %908 = vmatpush1.msra.mxu0 %v54
    %909 = vmatprep.subr.mxu0 0.0
    %910 = vmatpush1.msra.mxu0 0.0
    %911 = vmatprep.subr.mxu0 0.0
    %912 = vmatpush1.msra.mxu0 0.0
    %913 = vmatprep.subr.mxu0 0.0
    %914 = vmatpush1.msra.mxu0 0.0
    %915 = vmatprep.subr.mxu0 0.0
    %916 = vmatpush1.msra.mxu0 0.0
    %917 = vmatprep.subr.mxu0 0.0
    %918 = vmatpush1.msra.mxu0 0.0
    %919 = vmatprep.subr.mxu0 0.0
    %920 = vmatpush1.msra.mxu0 0.0
    %921 = vmatprep.subr.mxu0 0.0
    %922 = vmatpush1.msra.mxu0 0.0
    %923 = vmatprep.subr.mxu0 0.0
    %924 = vmatpush1.msra.mxu0 0.0
    %925 = vmatprep.subr.mxu0 0.0
    %926 = vmatpush1.msra.mxu0 0.0
    %927 = vmatprep.subr.mxu0 0.0
    %928 = vmatpush1.msra.mxu0 0.0
    %929 = vmatprep.subr.mxu0 0.0
    %930 = vmatpush1.msra.mxu0 0.0
    %931 = vmatprep.subr.mxu0 0.0
    %932 = vmatpush1.msra.mxu0 0.0
    %933 = vmatprep.subr.mxu0 0.0
    %934 = vmatpush1.msra.mxu0 0.0
    %935 = vmatprep.subr.mxu0 0.0
    %936 = vmatpush1.msra.mxu0 0.0
    %937 = vmatprep.subr.mxu0 0.0
    %938 = vmatpush1.msra.mxu0 0.0
    %939 = vmatprep.subr.mxu0 0.0
    %940 = vmatpush1.msra.mxu0 0.0
    %941 = vmatprep.subr.mxu0 0.0
    %942 = vmatpush1.msra.mxu0 0.0
    %943 = vmatprep.subr.mxu0 0.0
    %944 = vmatpush1.msra.mxu0 0.0
    %945 = vmatprep.subr.mxu0 0.0
    %946 = vmatpush1.msra.mxu0 0.0
    %947 = vmatprep.subr.mxu0 0.0
    %948 = vmatpush1.msra.mxu0 0.0
    %949 = vmatprep.subr.mxu0 0.0
    %950 = vmatpush1.msra.mxu0 0.0
    %951 = vmatprep.subr.mxu0 0.0
    %952 = vmatpush1.msra.mxu0 0.0
    %953 = vmatprep.subr.mxu0 0.0
    %954 = vmatpush1.msra.mxu0 0.0
    %955 = vmatprep.subr.mxu0 0.0
    %956 = vmatpush1.msra.mxu0 0.0
    %957 = vmatprep.subr.mxu0 0.0
    %958 = vmatpush1.msra.mxu0 0.0
    %959 = vmatprep.subr.mxu0 0.0
    %960 = vmatpush1.msra.mxu0 0.0
    %961 = vmatprep.subr.mxu0 0.0
    %962 = vmatpush1.msra.mxu0 0.0
    %963 = vmatprep.subr.mxu0 0.0
    %964 = vmatpush1.msra.mxu0 0.0
    %965 = vmatprep.mubr.f32.mxu0 0.0
    %966 = vmatmul.mubr.f32.gmra.mrb[0].mxu0 %v822
    %v967 = vpop.f32.mrb[0].mxu0
    %v968 = vadd.f32 0.0, %v967
    %v969 = vpop.f32.mrb[0].mxu0
    %970 = vdwg.mxu0
    %v971 = vadd.f32 %v818, %v968
    %v972 = vxor.u32 %v971, 2147483648
    %v973 = vmul.f32 %v972, 1.442695
    %v974 = vpow.pop %v973
    %v975 = vadd.f32 %v974, 1.0
    %v976 = vrcp.pop %v975
    %v977 = vmul.f32 1.0, %v976
    %978 = vmatprep.subr.mxu0 0.0
    %979 = vmatpush1.msra.mxu0 %v56
    %980 = vmatprep.subr.mxu0 0.0
    %981 = vmatpush1.msra.mxu0 %v57
    %982 = vmatprep.subr.mxu0 0.0
    %983 = vmatpush1.msra.mxu0 %v58
    %984 = vmatprep.subr.mxu0 0.0
    %985 = vmatpush1.msra.mxu0 %v59
    %986 = vmatprep.subr.mxu0 0.0
    %987 = vmatpush1.msra.mxu0 0.0
    %988 = vmatprep.subr.mxu0 0.0
    %989 = vmatpush1.msra.mxu0 0.0
    %990 = vmatprep.subr.mxu0 0.0
    %991 = vmatpush1.msra.mxu0 0.0
    %992 = vmatprep.subr.mxu0 0.0
    %993 = vmatpush1.msra.mxu0 0.0
    %994 = vmatprep.subr.mxu0 0.0
    %995 = vmatpush1.msra.mxu0 0.0
    %996 = vmatprep.subr.mxu0 0.0
    %997 = vmatpush1.msra.mxu0 0.0
    %998 = vmatprep.subr.mxu0 0.0
    %999 = vmatpush1.msra.mxu0 0.0
    %1000 = vmatprep.subr.mxu0 0.0
    %1001 = vmatpush1.msra.mxu0 0.0
    %1002 = vmatprep.subr.mxu0 0.0
    %1003 = vmatpush1.msra.mxu0 0.0
    %1004 = vmatprep.subr.mxu0 0.0
    %1005 = vmatpush1.msra.mxu0 0.0
    %1006 = vmatprep.subr.mxu0 0.0
    %1007 = vmatpush1.msra.mxu0 0.0
    %1008 = vmatprep.subr.mxu0 0.0
    %1009 = vmatpush1.msra.mxu0 0.0
    %1010 = vmatprep.subr.mxu0 0.0
    %1011 = vmatpush1.msra.mxu0 0.0
    %1012 = vmatprep.subr.mxu0 0.0
    %1013 = vmatpush1.msra.mxu0 0.0
    %1014 = vmatprep.subr.mxu0 0.0
    %1015 = vmatpush1.msra.mxu0 0.0
    %1016 = vmatprep.subr.mxu0 0.0
    %1017 = vmatpush1.msra.mxu0 0.0
    %1018 = vmatprep.subr.mxu0 0.0
    %1019 = vmatpush1.msra.mxu0 0.0
    %1020 = vmatprep.subr.mxu0 0.0
    %1021 = vmatpush1.msra.mxu0 0.0
    %1022 = vmatprep.subr.mxu0 0.0
    %1023 = vmatpush1.msra.mxu0 0.0
    %1024 = vmatprep.subr.mxu0 0.0
    %1025 = vmatpush1.msra.mxu0 0.0
    %1026 = vmatprep.subr.mxu0 0.0
    %1027 = vmatpush1.msra.mxu0 0.0
    %1028 = vmatprep.subr.mxu0 0.0
    %1029 = vmatpush1.msra.mxu0 0.0
    %1030 = vmatprep.subr.mxu0 0.0
    %1031 = vmatpush1.msra.mxu0 0.0
    %1032 = vmatprep.subr.mxu0 0.0
    %1033 = vmatpush1.msra.mxu0 0.0
    %1034 = vmatprep.subr.mxu0 0.0
    %1035 = vmatpush1.msra.mxu0 0.0
    %1036 = vmatprep.subr.mxu0 0.0
    %1037 = vmatpush1.msra.mxu0 0.0
    %1038 = vmatprep.subr.mxu0 0.0
    %1039 = vmatpush1.msra.mxu0 0.0
    %1040 = vmatprep.subr.mxu0 0.0
    %1041 = vmatpush1.msra.mxu0 0.0
    %1042 = vmatprep.mubr.f32.mxu0 0.0
    %1043 = vmatmul.mubr.f32.gmra.mrb[0].mxu0 %v822
    %v1044 = vpop.f32.mrb[0].mxu0
    %v1045 = vadd.f32 %v228, %v1044
    %v1046 = vpop.f32.mrb[0].mxu0
    %1047 = vdwg.mxu0
    %v1048 = vmul.f32 %v900, %v1045
    %v1049 = vadd.f32 %v820, %v1048
    %v1050 = vtanh.pop %v1049
    %v1051 = vsub.f32 1.0, %v977
    %v1052 = vmul.f32 %v1051, %v1050
    %v1053 = vmul.f32 %v977, %v814
    %v1054 = vadd.f32 %v1052, %v1053
    %s1055 = scalar_lea.vmem %s1, 24
    %v1056 = vld [vmem:[%s1055] sm:$0xff]
    %v1057 = vsub.f32 %v1054, %v814
    %1059 = vset.pattern.permute.xlu0 0
    %1060 = vperm.xlu0 %1059, %v1056
    %v1061 = vpop.permute.xlu0 %1060
    %v1063 = vmul.f32 %v1061, %v1057
    %v1064 = vadd.f32 %v814, %v1063
    %s1065 = scalar_lea.vmem [#allocation2], 96
    %v1066 = vld [vmem:[%s1065] sm:$0xff]
    %s1067 = scalar_lea.vmem [#allocation2], 104
    %v1068 = vld [vmem:[%s1067] sm:$0xff]
    %s1069 = scalar_lea.vmem [#allocation2], 112
    %v1070 = vld [vmem:[%s1069] sm:$0xff]
    %v1072 = vsel %vm66, %v1064, 0
    %1074 = vmatprep.subr.mxu0 0.0
    %1075 = vmatpush1.msra.mxu0 %v46
    %1076 = vmatprep.subr.mxu0 0.0
    %1077 = vmatpush1.msra.mxu0 %v47
    %1078 = vmatprep.subr.mxu0 0.0
    %1079 = vmatpush1.msra.mxu0 %v48
    %1080 = vmatprep.subr.mxu0 0.0
    %1081 = vmatpush1.msra.mxu0 %v49
    %1082 = vmatprep.subr.mxu0 0.0
    %1083 = vmatpush1.msra.mxu0 0.0
    %1084 = vmatprep.subr.mxu0 0.0
    %1085 = vmatpush1.msra.mxu0 0.0
    %1086 = vmatprep.subr.mxu0 0.0
    %1087 = vmatpush1.msra.mxu0 0.0
    %1088 = vmatprep.subr.mxu0 0.0
    %1089 = vmatpush1.msra.mxu0 0.0
    %1090 = vmatprep.subr.mxu0 0.0
    %1091 = vmatpush1.msra.mxu0 0.0
    %1092 = vmatprep.subr.mxu0 0.0
    %1093 = vmatpush1.msra.mxu0 0.0
    %1094 = vmatprep.subr.mxu0 0.0
    %1095 = vmatpush1.msra.mxu0 0.0
    %1096 = vmatprep.subr.mxu0 0.0
    %1097 = vmatpush1.msra.mxu0 0.0
    %1098 = vmatprep.subr.mxu0 0.0
    %1099 = vmatpush1.msra.mxu0 0.0
    %1100 = vmatprep.subr.mxu0 0.0
    %1101 = vmatpush1.msra.mxu0 0.0
    %1102 = vmatprep.subr.mxu0 0.0
    %1103 = vmatpush1.msra.mxu0 0.0
    %1104 = vmatprep.subr.mxu0 0.0
    %1105 = vmatpush1.msra.mxu0 0.0
    %1106 = vmatprep.subr.mxu0 0.0
    %1107 = vmatpush1.msra.mxu0 0.0
    %1108 = vmatprep.subr.mxu0 0.0
    %1109 = vmatpush1.msra.mxu0 0.0
    %1110 = vmatprep.subr.mxu0 0.0
    %1111 = vmatpush1.msra.mxu0 0.0
    %1112 = vmatprep.subr.mxu0 0.0
    %1113 = vmatpush1.msra.mxu0 0.0
    %1114 = vmatprep.subr.mxu0 0.0
    %1115 = vmatpush1.msra.mxu0 0.0
    %1116 = vmatprep.subr.mxu0 0.0
    %1117 = vmatpush1.msra.mxu0 0.0
    %1118 = vmatprep.subr.mxu0 0.0
    %1119 = vmatpush1.msra.mxu0 0.0
    %1120 = vmatprep.subr.mxu0 0.0
    %1121 = vmatpush1.msra.mxu0 0.0
    %1122 = vmatprep.subr.mxu0 0.0
    %1123 = vmatpush1.msra.mxu0 0.0
    %1124 = vmatprep.subr.mxu0 0.0
    %1125 = vmatpush1.msra.mxu0 0.0
    %1126 = vmatprep.subr.mxu0 0.0
    %1127 = vmatpush1.msra.mxu0 0.0
    %1128 = vmatprep.subr.mxu0 0.0
    %1129 = vmatpush1.msra.mxu0 0.0
    %1130 = vmatprep.subr.mxu0 0.0
    %1131 = vmatpush1.msra.mxu0 0.0
    %1132 = vmatprep.subr.mxu0 0.0
    %1133 = vmatpush1.msra.mxu0 0.0
    %1134 = vmatprep.subr.mxu0 0.0
    %1135 = vmatpush1.msra.mxu0 0.0
    %1136 = vmatprep.subr.mxu0 0.0
    %1137 = vmatpush1.msra.mxu0 0.0
    %1138 = vmatprep.mubr.f32.mxu0 0.0
    %1139 = vmatmul.mubr.f32.gmra.mrb[0].mxu0 %v1072
    %v1140 = vpop.f32.mrb[0].mxu0
    %v1141 = vadd.f32 0.0, %v1140
    %v1142 = vpop.f32.mrb[0].mxu0
    %1143 = vdwg.mxu0
    %v1144 = vadd.f32 %v1066, %v1141
    %v1145 = vxor.u32 %v1144, 2147483648
    %v1146 = vmul.f32 %v1145, 1.442695
    %v1147 = vpow.pop %v1146
    %v1148 = vadd.f32 %v1147, 1.0
    %v1149 = vrcp.pop %v1148
    %v1150 = vmul.f32 1.0, %v1149
    %1151 = vmatprep.subr.mxu0 0.0
    %1152 = vmatpush1.msra.mxu0 %v51
    %1153 = vmatprep.subr.mxu0 0.0
    %1154 = vmatpush1.msra.mxu0 %v52
    %1155 = vmatprep.subr.mxu0 0.0
    %1156 = vmatpush1.msra.mxu0 %v53
    %1157 = vmatprep.subr.mxu0 0.0
    %1158 = vmatpush1.msra.mxu0 %v54
    %1159 = vmatprep.subr.mxu0 0.0
    %1160 = vmatpush1.msra.mxu0 0.0
    %1161 = vmatprep.subr.mxu0 0.0
    %1162 = vmatpush1.msra.mxu0 0.0
    %1163 = vmatprep.subr.mxu0 0.0
    %1164 = vmatpush1.msra.mxu0 0.0
    %1165 = vmatprep.subr.mxu0 0.0
    %1166 = vmatpush1.msra.mxu0 0.0
    %1167 = vmatprep.subr.mxu0 0.0
    %1168 = vmatpush1.msra.mxu0 0.0
    %1169 = vmatprep.subr.mxu0 0.0
    %1170 = vmatpush1.msra.mxu0 0.0
    %1171 = vmatprep.subr.mxu0 0.0
    %1172 = vmatpush1.msra.mxu0 0.0
    %1173 = vmatprep.subr.mxu0 0.0
    %1174 = vmatpush1.msra.mxu0 0.0
    %1175 = vmatprep.subr.mxu0 0.0
    %1176 = vmatpush1.msra.mxu0 0.0
    %1177 = vmatprep.subr.mxu0 0.0
    %1178 = vmatpush1.msra.mxu0 0.0
    %1179 = vmatprep.subr.mxu0 0.0
    %1180 = vmatpush1.msra.mxu0 0.0
    %1181 = vmatprep.subr.mxu0 0.0
    %1182 = vmatpush1.msra.mxu0 0.0
    %1183 = vmatprep.subr.mxu0 0.0
    %1184 = vmatpush1.msra.mxu0 0.0
    %1185 = vmatprep.subr.mxu0 0.0
    %1186 = vmatpush1.msra.mxu0 0.0
    %1187 = vmatprep.subr.mxu0 0.0
    %1188 = vmatpush1.msra.mxu0 0.0
    %1189 = vmatprep.subr.mxu0 0.0
    %1190 = vmatpush1.msra.mxu0 0.0
    %1191 = vmatprep.subr.mxu0 0.0
    %1192 = vmatpush1.msra.mxu0 0.0
    %1193 = vmatprep.subr.mxu0 0.0
    %1194 = vmatpush1.msra.mxu0 0.0
    %1195 = vmatprep.subr.mxu0 0.0
    %1196 = vmatpush1.msra.mxu0 0.0
    %1197 = vmatprep.subr.mxu0 0.0
    %1198 = vmatpush1.msra.mxu0 0.0
    %1199 = vmatprep.subr.mxu0 0.0
    %1200 = vmatpush1.msra.mxu0 0.0
    %1201 = vmatprep.subr.mxu0 0.0
    %1202 = vmatpush1.msra.mxu0 0.0
    %1203 = vmatprep.subr.mxu0 0.0
    %1204 = vmatpush1.msra.mxu0 0.0
    %1205 = vmatprep.subr.mxu0 0.0
    %1206 = vmatpush1.msra.mxu0 0.0
    %1207 = vmatprep.subr.mxu0 0.0
    %1208 = vmatpush1.msra.mxu0 0.0
    %1209 = vmatprep.subr.mxu0 0.0
    %1210 = vmatpush1.msra.mxu0 0.0
    %1211 = vmatprep.subr.mxu0 0.0
    %1212 = vmatpush1.msra.mxu0 0.0
    %1213 = vmatprep.subr.mxu0 0.0
    %1214 = vmatpush1.msra.mxu0 0.0
    %1215 = vmatprep.mubr.f32.mxu0 0.0
    %1216 = vmatmul.mubr.f32.gmra.mrb[0].mxu0 %v1072
    %v1217 = vpop.f32.mrb[0].mxu0
    %v1218 = vadd.f32 0.0, %v1217
    %v1219 = vpop.f32.mrb[0].mxu0
    %1220 = vdwg.mxu0
    %v1221 = vadd.f32 %v1068, %v1218
    %v1222 = vxor.u32 %v1221, 2147483648
    %v1223 = vmul.f32 %v1222, 1.442695
    %v1224 = vpow.pop %v1223
    %v1225 = vadd.f32 %v1224, 1.0
    %v1226 = vrcp.pop %v1225
    %v1227 = vmul.f32 1.0, %v1226
    %1228 = vmatprep.subr.mxu0 0.0
    %1229 = vmatpush1.msra.mxu0 %v56
    %1230 = vmatprep.subr.mxu0 0.0
    %1231 = vmatpush1.msra.mxu0 %v57
    %1232 = vmatprep.subr.mxu0 0.0
    %1233 = vmatpush1.msra.mxu0 %v58
    %1234 = vmatprep.subr.mxu0 0.0
    %1235 = vmatpush1.msra.mxu0 %v59
    %1236 = vmatprep.subr.mxu0 0.0
    %1237 = vmatpush1.msra.mxu0 0.0
    %1238 = vmatprep.subr.mxu0 0.0
    %1239 = vmatpush1.msra.mxu0 0.0
    %1240 = vmatprep.subr.mxu0 0.0
    %1241 = vmatpush1.msra.mxu0 0.0
    %1242 = vmatprep.subr.mxu0 0.0
    %1243 = vmatpush1.msra.mxu0 0.0
    %1244 = vmatprep.subr.mxu0 0.0
    %1245 = vmatpush1.msra.mxu0 0.0
    %1246 = vmatprep.subr.mxu0 0.0
    %1247 = vmatpush1.msra.mxu0 0.0
    %1248 = vmatprep.subr.mxu0 0.0
    %1249 = vmatpush1.msra.mxu0 0.0
    %1250 = vmatprep.subr.mxu0 0.0
    %1251 = vmatpush1.msra.mxu0 0.0
    %1252 = vmatprep.subr.mxu0 0.0
    %1253 = vmatpush1.msra.mxu0 0.0
    %1254 = vmatprep.subr.mxu0 0.0
    %1255 = vmatpush1.msra.mxu0 0.0
    %1256 = vmatprep.subr.mxu0 0.0
    %1257 = vmatpush1.msra.mxu0 0.0
    %1258 = vmatprep.subr.mxu0 0.0
    %1259 = vmatpush1.msra.mxu0 0.0
    %1260 = vmatprep.subr.mxu0 0.0
    %1261 = vmatpush1.msra.mxu0 0.0
    %1262 = vmatprep.subr.mxu0 0.0
    %1263 = vmatpush1.msra.mxu0 0.0
    %1264 = vmatprep.subr.mxu0 0.0
    %1265 = vmatpush1.msra.mxu0 0.0
    %1266 = vmatprep.subr.mxu0 0.0
    %1267 = vmatpush1.msra.mxu0 0.0
    %1268 = vmatprep.subr.mxu0 0.0
    %1269 = vmatpush1.msra.mxu0 0.0
    %1270 = vmatprep.subr.mxu0 0.0
    %1271 = vmatpush1.msra.mxu0 0.0
    %1272 = vmatprep.subr.mxu0 0.0
    %1273 = vmatpush1.msra.mxu0 0.0
    %1274 = vmatprep.subr.mxu0 0.0
    %1275 = vmatpush1.msra.mxu0 0.0
    %1276 = vmatprep.subr.mxu0 0.0
    %1277 = vmatpush1.msra.mxu0 0.0
    %1278 = vmatprep.subr.mxu0 0.0
    %1279 = vmatpush1.msra.mxu0 0.0
    %1280 = vmatprep.subr.mxu0 0.0
    %1281 = vmatpush1.msra.mxu0 0.0
    %1282 = vmatprep.subr.mxu0 0.0
    %1283 = vmatpush1.msra.mxu0 0.0
    %1284 = vmatprep.subr.mxu0 0.0
    %1285 = vmatpush1.msra.mxu0 0.0
    %1286 = vmatprep.subr.mxu0 0.0
    %1287 = vmatpush1.msra.mxu0 0.0
    %1288 = vmatprep.subr.mxu0 0.0
    %1289 = vmatpush1.msra.mxu0 0.0
    %1290 = vmatprep.subr.mxu0 0.0
    %1291 = vmatpush1.msra.mxu0 0.0
    %1292 = vmatprep.mubr.f32.mxu0 0.0
    %1293 = vmatmul.mubr.f32.gmra.mrb[0].mxu0 %v1072
    %v1294 = vpop.f32.mrb[0].mxu0
    %v1295 = vadd.f32 %v228, %v1294
    %v1296 = vpop.f32.mrb[0].mxu0
    %1297 = vdwg.mxu0
    %v1298 = vmul.f32 %v1150, %v1295
    %v1299 = vadd.f32 %v1070, %v1298
    %v1300 = vtanh.pop %v1299
    %v1301 = vsub.f32 1.0, %v1227
    %v1302 = vmul.f32 %v1301, %v1300
    %v1303 = vmul.f32 %v1227, %v1064
    %v1304 = vadd.f32 %v1302, %v1303
    %s1305 = scalar_lea.vmem %s1, 32
    %v1306 = vld [vmem:[%s1305] sm:$0xff]
    %v1307 = vsub.f32 %v1304, %v1064
    %1309 = vset.pattern.permute.xlu0 0
    %1310 = vperm.xlu0 %1309, %v1306
    %v1311 = vpop.permute.xlu0 %1310
    %v1313 = vmul.f32 %v1311, %v1307
    %v1314 = vadd.f32 %v1064, %v1313
    %s1315 = scalar_lea.vmem [#allocation2], 120
    %v1316 = vld [vmem:[%s1315] sm:$0xff]
    %s1317 = scalar_lea.vmem [#allocation2], 128
    %v1318 = vld [vmem:[%s1317] sm:$0xff]
    %s1319 = scalar_lea.vmem [#allocation2], 136
    %v1320 = vld [vmem:[%s1319] sm:$0xff]
    %v1322 = vsel %vm66, %v1314, 0
    %1324 = vmatprep.subr.mxu0 0.0
    %1325 = vmatpush1.msra.mxu0 %v46
    %1326 = vmatprep.subr.mxu0 0.0
    %1327 = vmatpush1.msra.mxu0 %v47
    %1328 = vmatprep.subr.mxu0 0.0
    %1329 = vmatpush1.msra.mxu0 %v48
    %1330 = vmatprep.subr.mxu0 0.0
    %1331 = vmatpush1.msra.mxu0 %v49
    %1332 = vmatprep.subr.mxu0 0.0
    %1333 = vmatpush1.msra.mxu0 0.0
    %1334 = vmatprep.subr.mxu0 0.0
    %1335 = vmatpush1.msra.mxu0 0.0
    %1336 = vmatprep.subr.mxu0 0.0
    %1337 = vmatpush1.msra.mxu0 0.0
    %1338 = vmatprep.subr.mxu0 0.0
    %1339 = vmatpush1.msra.mxu0 0.0
    %1340 = vmatprep.subr.mxu0 0.0
    %1341 = vmatpush1.msra.mxu0 0.0
    %1342 = vmatprep.subr.mxu0 0.0
    %1343 = vmatpush1.msra.mxu0 0.0
    %1344 = vmatprep.subr.mxu0 0.0
    %1345 = vmatpush1.msra.mxu0 0.0
    %1346 = vmatprep.subr.mxu0 0.0
    %1347 = vmatpush1.msra.mxu0 0.0
    %1348 = vmatprep.subr.mxu0 0.0
    %1349 = vmatpush1.msra.mxu0 0.0
    %1350 = vmatprep.subr.mxu0 0.0
    %1351 = vmatpush1.msra.mxu0 0.0
    %1352 = vmatprep.subr.mxu0 0.0
    %1353 = vmatpush1.msra.mxu0 0.0
    %1354 = vmatprep.subr.mxu0 0.0
    %1355 = vmatpush1.msra.mxu0 0.0
    %1356 = vmatprep.subr.mxu0 0.0
    %1357 = vmatpush1.msra.mxu0 0.0
    %1358 = vmatprep.subr.mxu0 0.0
    %1359 = vmatpush1.msra.mxu0 0.0
    %1360 = vmatprep.subr.mxu0 0.0
    %1361 = vmatpush1.msra.mxu0 0.0
    %1362 = vmatprep.subr.mxu0 0.0
    %1363 = vmatpush1.msra.mxu0 0.0
    %1364 = vmatprep.subr.mxu0 0.0
    %1365 = vmatpush1.msra.mxu0 0.0
    %1366 = vmatprep.subr.mxu0 0.0
    %1367 = vmatpush1.msra.mxu0 0.0
    %1368 = vmatprep.subr.mxu0 0.0
    %1369 = vmatpush1.msra.mxu0 0.0
    %1370 = vmatprep.subr.mxu0 0.0
    %1371 = vmatpush1.msra.mxu0 0.0
    %1372 = vmatprep.subr.mxu0 0.0
    %1373 = vmatpush1.msra.mxu0 0.0
    %1374 = vmatprep.subr.mxu0 0.0
    %1375 = vmatpush1.msra.mxu0 0.0
    %1376 = vmatprep.subr.mxu0 0.0
    %1377 = vmatpush1.msra.mxu0 0.0
    %1378 = vmatprep.subr.mxu0 0.0
    %1379 = vmatpush1.msra.mxu0 0.0
    %1380 = vmatprep.subr.mxu0 0.0
    %1381 = vmatpush1.msra.mxu0 0.0
    %1382 = vmatprep.subr.mxu0 0.0
    %1383 = vmatpush1.msra.mxu0 0.0
    %1384 = vmatprep.subr.mxu0 0.0
    %1385 = vmatpush1.msra.mxu0 0.0
    %1386 = vmatprep.subr.mxu0 0.0
    %1387 = vmatpush1.msra.mxu0 0.0
    %1388 = vmatprep.mubr.f32.mxu0 0.0
    %1389 = vmatmul.mubr.f32.gmra.mrb[0].mxu0 %v1322
    %v1390 = vpop.f32.mrb[0].mxu0
    %v1391 = vadd.f32 0.0, %v1390
    %v1392 = vpop.f32.mrb[0].mxu0
    %1393 = vdwg.mxu0
    %v1394 = vadd.f32 %v1316, %v1391
    %v1395 = vxor.u32 %v1394, 2147483648
    %v1396 = vmul.f32 %v1395, 1.442695
    %v1397 = vpow.pop %v1396
    %v1398 = vadd.f32 %v1397, 1.0
    %v1399 = vrcp.pop %v1398
    %v1400 = vmul.f32 1.0, %v1399
    %1401 = vmatprep.subr.mxu0 0.0
    %1402 = vmatpush1.msra.mxu0 %v51
    %1403 = vmatprep.subr.mxu0 0.0
    %1404 = vmatpush1.msra.mxu0 %v52
    %1405 = vmatprep.subr.mxu0 0.0
    %1406 = vmatpush1.msra.mxu0 %v53
    %1407 = vmatprep.subr.mxu0 0.0
    %1408 = vmatpush1.msra.mxu0 %v54
    %1409 = vmatprep.subr.mxu0 0.0
    %1410 = vmatpush1.msra.mxu0 0.0
    %1411 = vmatprep.subr.mxu0 0.0
    %1412 = vmatpush1.msra.mxu0 0.0
    %1413 = vmatprep.subr.mxu0 0.0
    %1414 = vmatpush1.msra.mxu0 0.0
    %1415 = vmatprep.subr.mxu0 0.0
    %1416 = vmatpush1.msra.mxu0 0.0
    %1417 = vmatprep.subr.mxu0 0.0
    %1418 = vmatpush1.msra.mxu0 0.0
    %1419 = vmatprep.subr.mxu0 0.0
    %1420 = vmatpush1.msra.mxu0 0.0
    %1421 = vmatprep.subr.mxu0 0.0
    %1422 = vmatpush1.msra.mxu0 0.0
    %1423 = vmatprep.subr.mxu0 0.0
    %1424 = vmatpush1.msra.mxu0 0.0
    %1425 = vmatprep.subr.mxu0 0.0
    %1426 = vmatpush1.msra.mxu0 0.0
    %1427 = vmatprep.subr.mxu0 0.0
    %1428 = vmatpush1.msra.mxu0 0.0
    %1429 = vmatprep.subr.mxu0 0.0
    %1430 = vmatpush1.msra.mxu0 0.0
    %1431 = vmatprep.subr.mxu0 0.0
    %1432 = vmatpush1.msra.mxu0 0.0
    %1433 = vmatprep.subr.mxu0 0.0
    %1434 = vmatpush1.msra.mxu0 0.0
    %1435 = vmatprep.subr.mxu0 0.0
    %1436 = vmatpush1.msra.mxu0 0.0
    %1437 = vmatprep.subr.mxu0 0.0
    %1438 = vmatpush1.msra.mxu0 0.0
    %1439 = vmatprep.subr.mxu0 0.0
    %1440 = vmatpush1.msra.mxu0 0.0
    %1441 = vmatprep.subr.mxu0 0.0
    %1442 = vmatpush1.msra.mxu0 0.0
    %1443 = vmatprep.subr.mxu0 0.0
    %1444 = vmatpush1.msra.mxu0 0.0
    %1445 = vmatprep.subr.mxu0 0.0
    %1446 = vmatpush1.msra.mxu0 0.0
    %1447 = vmatprep.subr.mxu0 0.0
    %1448 = vmatpush1.msra.mxu0 0.0
    %1449 = vmatprep.subr.mxu0 0.0
    %1450 = vmatpush1.msra.mxu0 0.0
    %1451 = vmatprep.subr.mxu0 0.0
    %1452 = vmatpush1.msra.mxu0 0.0
    %1453 = vmatprep.subr.mxu0 0.0
    %1454 = vmatpush1.msra.mxu0 0.0
    %1455 = vmatprep.subr.mxu0 0.0
    %1456 = vmatpush1.msra.mxu0 0.0
    %1457 = vmatprep.subr.mxu0 0.0
    %1458 = vmatpush1.msra.mxu0 0.0
    %1459 = vmatprep.subr.mxu0 0.0
    %1460 = vmatpush1.msra.mxu0 0.0
    %1461 = vmatprep.subr.mxu0 0.0
    %1462 = vmatpush1.msra.mxu0 0.0
    %1463 = vmatprep.subr.mxu0 0.0
    %1464 = vmatpush1.msra.mxu0 0.0
    %1465 = vmatprep.mubr.f32.mxu0 0.0
    %1466 = vmatmul.mubr.f32.gmra.mrb[0].mxu0 %v1322
    %v1467 = vpop.f32.mrb[0].mxu0
    %v1468 = vadd.f32 0.0, %v1467
    %v1469 = vpop.f32.mrb[0].mxu0
    %1470 = vdwg.mxu0
    %v1471 = vadd.f32 %v1318, %v1468
    %v1472 = vxor.u32 %v1471, 2147483648
    %v1473 = vmul.f32 %v1472, 1.442695
    %v1474 = vpow.pop %v1473
    %v1475 = vadd.f32 %v1474, 1.0
    %v1476 = vrcp.pop %v1475
    %v1477 = vmul.f32 1.0, %v1476
    %1478 = vmatprep.subr.mxu0 0.0
    %1479 = vmatpush1.msra.mxu0 %v56
    %1480 = vmatprep.subr.mxu0 0.0
    %1481 = vmatpush1.msra.mxu0 %v57
    %1482 = vmatprep.subr.mxu0 0.0
    %1483 = vmatpush1.msra.mxu0 %v58
    %1484 = vmatprep.subr.mxu0 0.0
    %1485 = vmatpush1.msra.mxu0 %v59
    %1486 = vmatprep.subr.mxu0 0.0
    %1487 = vmatpush1.msra.mxu0 0.0
    %1488 = vmatprep.subr.mxu0 0.0
    %1489 = vmatpush1.msra.mxu0 0.0
    %1490 = vmatprep.subr.mxu0 0.0
    %1491 = vmatpush1.msra.mxu0 0.0
    %1492 = vmatprep.subr.mxu0 0.0
    %1493 = vmatpush1.msra.mxu0 0.0
    %1494 = vmatprep.subr.mxu0 0.0
    %1495 = vmatpush1.msra.mxu0 0.0
    %1496 = vmatprep.subr.mxu0 0.0
    %1497 = vmatpush1.msra.mxu0 0.0
    %1498 = vmatprep.subr.mxu0 0.0
    %1499 = vmatpush1.msra.mxu0 0.0
    %1500 = vmatprep.subr.mxu0 0.0
    %1501 = vmatpush1.msra.mxu0 0.0
    %1502 = vmatprep.subr.mxu0 0.0
    %1503 = vmatpush1.msra.mxu0 0.0
    %1504 = vmatprep.subr.mxu0 0.0
    %1505 = vmatpush1.msra.mxu0 0.0
    %1506 = vmatprep.subr.mxu0 0.0
    %1507 = vmatpush1.msra.mxu0 0.0
    %1508 = vmatprep.subr.mxu0 0.0
    %1509 = vmatpush1.msra.mxu0 0.0
    %1510 = vmatprep.subr.mxu0 0.0
    %1511 = vmatpush1.msra.mxu0 0.0
    %1512 = vmatprep.subr.mxu0 0.0
    %1513 = vmatpush1.msra.mxu0 0.0
    %1514 = vmatprep.subr.mxu0 0.0
    %1515 = vmatpush1.msra.mxu0 0.0
    %1516 = vmatprep.subr.mxu0 0.0
    %1517 = vmatpush1.msra.mxu0 0.0
    %1518 = vmatprep.subr.mxu0 0.0
    %1519 = vmatpush1.msra.mxu0 0.0
    %1520 = vmatprep.subr.mxu0 0.0
    %1521 = vmatpush1.msra.mxu0 0.0
    %1522 = vmatprep.subr.mxu0 0.0
    %1523 = vmatpush1.msra.mxu0 0.0
    %1524 = vmatprep.subr.mxu0 0.0
    %1525 = vmatpush1.msra.mxu0 0.0
    %1526 = vmatprep.subr.mxu0 0.0
    %1527 = vmatpush1.msra.mxu0 0.0
    %1528 = vmatprep.subr.mxu0 0.0
    %1529 = vmatpush1.msra.mxu0 0.0
    %1530 = vmatprep.subr.mxu0 0.0
    %1531 = vmatpush1.msra.mxu0 0.0
    %1532 = vmatprep.subr.mxu0 0.0
    %1533 = vmatpush1.msra.mxu0 0.0
    %1534 = vmatprep.subr.mxu0 0.0
    %1535 = vmatpush1.msra.mxu0 0.0
    %1536 = vmatprep.subr.mxu0 0.0
    %1537 = vmatpush1.msra.mxu0 0.0
    %1538 = vmatprep.subr.mxu0 0.0
    %1539 = vmatpush1.msra.mxu0 0.0
    %1540 = vmatprep.subr.mxu0 0.0
    %1541 = vmatpush1.msra.mxu0 0.0
    %1542 = vmatprep.mubr.f32.mxu0 0.0
    %1543 = vmatmul.mubr.f32.gmra.mrb[0].mxu0 %v1322
    %v1544 = vpop.f32.mrb[0].mxu0
    %v1545 = vadd.f32 %v228, %v1544
    %v1546 = vpop.f32.mrb[0].mxu0
    %1547 = vdwg.mxu0
    %v1548 = vmul.f32 %v1400, %v1545
    %v1549 = vadd.f32 %v1320, %v1548
    %v1550 = vtanh.pop %v1549
    %v1551 = vsub.f32 1.0, %v1477
    %v1552 = vmul.f32 %v1551, %v1550
    %v1553 = vmul.f32 %v1477, %v1314
    %v1554 = vadd.f32 %v1552, %v1553
    %s1555 = scalar_lea.vmem %s1, 40
    %v1556 = vld [vmem:[%s1555] sm:$0xff]
    %v1557 = vsub.f32 %v1554, %v1314
    %1559 = vset.pattern.permute.xlu0 0
    %1560 = vperm.xlu0 %1559, %v1556
    %v1561 = vpop.permute.xlu0 %1560
    %v1563 = vmul.f32 %v1561, %v1557
    %v1564 = vadd.f32 %v1314, %v1563
    %s1565 = scalar_lea.vmem [#allocation2], 144
    %v1566 = vld [vmem:[%s1565] sm:$0xff]
    %s1567 = scalar_lea.vmem [#allocation2], 152
    %v1568 = vld [vmem:[%s1567] sm:$0xff]
    %s1569 = scalar_lea.vmem [#allocation2], 160
    %v1570 = vld [vmem:[%s1569] sm:$0xff]
    %v1572 = vsel %vm66, %v1564, 0
    %1574 = vmatprep.subr.mxu0 0.0
    %1575 = vmatpush1.msra.mxu0 %v46
    %1576 = vmatprep.subr.mxu0 0.0
    %1577 = vmatpush1.msra.mxu0 %v47
    %1578 = vmatprep.subr.mxu0 0.0
    %1579 = vmatpush1.msra.mxu0 %v48
    %1580 = vmatprep.subr.mxu0 0.0
    %1581 = vmatpush1.msra.mxu0 %v49
    %1582 = vmatprep.subr.mxu0 0.0
    %1583 = vmatpush1.msra.mxu0 0.0
    %1584 = vmatprep.subr.mxu0 0.0
    %1585 = vmatpush1.msra.mxu0 0.0
    %1586 = vmatprep.subr.mxu0 0.0
    %1587 = vmatpush1.msra.mxu0 0.0
    %1588 = vmatprep.subr.mxu0 0.0
    %1589 = vmatpush1.msra.mxu0 0.0
    %1590 = vmatprep.subr.mxu0 0.0
    %1591 = vmatpush1.msra.mxu0 0.0
    %1592 = vmatprep.subr.mxu0 0.0
    %1593 = vmatpush1.msra.mxu0 0.0
    %1594 = vmatprep.subr.mxu0 0.0
    %1595 = vmatpush1.msra.mxu0 0.0
    %1596 = vmatprep.subr.mxu0 0.0
    %1597 = vmatpush1.msra.mxu0 0.0
    %1598 = vmatprep.subr.mxu0 0.0
    %1599 = vmatpush1.msra.mxu0 0.0
    %1600 = vmatprep.subr.mxu0 0.0
    %1601 = vmatpush1.msra.mxu0 0.0
    %1602 = vmatprep.subr.mxu0 0.0
    %1603 = vmatpush1.msra.mxu0 0.0
    %1604 = vmatprep.subr.mxu0 0.0
    %1605 = vmatpush1.msra.mxu0 0.0
    %1606 = vmatprep.subr.mxu0 0.0
    %1607 = vmatpush1.msra.mxu0 0.0
    %1608 = vmatprep.subr.mxu0 0.0
    %1609 = vmatpush1.msra.mxu0 0.0
    %1610 = vmatprep.subr.mxu0 0.0
    %1611 = vmatpush1.msra.mxu0 0.0
    %1612 = vmatprep.subr.mxu0 0.0
    %1613 = vmatpush1.msra.mxu0 0.0
    %1614 = vmatprep.subr.mxu0 0.0
    %1615 = vmatpush1.msra.mxu0 0.0
    %1616 = vmatprep.subr.mxu0 0.0
    %1617 = vmatpush1.msra.mxu0 0.0
    %1618 = vmatprep.subr.mxu0 0.0
    %1619 = vmatpush1.msra.mxu0 0.0
    %1620 = vmatprep.subr.mxu0 0.0
    %1621 = vmatpush1.msra.mxu0 0.0
    %1622 = vmatprep.subr.mxu0 0.0
    %1623 = vmatpush1.msra.mxu0 0.0
    %1624 = vmatprep.subr.mxu0 0.0
    %1625 = vmatpush1.msra.mxu0 0.0
    %1626 = vmatprep.subr.mxu0 0.0
    %1627 = vmatpush1.msra.mxu0 0.0
    %1628 = vmatprep.subr.mxu0 0.0
    %1629 = vmatpush1.msra.mxu0 0.0
    %1630 = vmatprep.subr.mxu0 0.0
    %1631 = vmatpush1.msra.mxu0 0.0
    %1632 = vmatprep.subr.mxu0 0.0
    %1633 = vmatpush1.msra.mxu0 0.0
    %1634 = vmatprep.subr.mxu0 0.0
    %1635 = vmatpush1.msra.mxu0 0.0
    %1636 = vmatprep.subr.mxu0 0.0
    %1637 = vmatpush1.msra.mxu0 0.0
    %1638 = vmatprep.mubr.f32.mxu0 0.0
    %1639 = vmatmul.mubr.f32.gmra.mrb[0].mxu0 %v1572
    %v1640 = vpop.f32.mrb[0].mxu0
    %v1641 = vadd.f32 0.0, %v1640
    %v1642 = vpop.f32.mrb[0].mxu0
    %1643 = vdwg.mxu0
    %v1644 = vadd.f32 %v1566, %v1641
    %v1645 = vxor.u32 %v1644, 2147483648
    %v1646 = vmul.f32 %v1645, 1.442695
    %v1647 = vpow.pop %v1646
    %v1648 = vadd.f32 %v1647, 1.0
    %v1649 = vrcp.pop %v1648
    %v1650 = vmul.f32 1.0, %v1649
    %1651 = vmatprep.subr.mxu0 0.0
    %1652 = vmatpush1.msra.mxu0 %v51
    %1653 = vmatprep.subr.mxu0 0.0
    %1654 = vmatpush1.msra.mxu0 %v52
    %1655 = vmatprep.subr.mxu0 0.0
    %1656 = vmatpush1.msra.mxu0 %v53
    %1657 = vmatprep.subr.mxu0 0.0
    %1658 = vmatpush1.msra.mxu0 %v54
    %1659 = vmatprep.subr.mxu0 0.0
    %1660 = vmatpush1.msra.mxu0 0.0
    %1661 = vmatprep.subr.mxu0 0.0
    %1662 = vmatpush1.msra.mxu0 0.0
    %1663 = vmatprep.subr.mxu0 0.0
    %1664 = vmatpush1.msra.mxu0 0.0
    %1665 = vmatprep.subr.mxu0 0.0
    %1666 = vmatpush1.msra.mxu0 0.0
    %1667 = vmatprep.subr.mxu0 0.0
    %1668 = vmatpush1.msra.mxu0 0.0
    %1669 = vmatprep.subr.mxu0 0.0
    %1670 = vmatpush1.msra.mxu0 0.0
    %1671 = vmatprep.subr.mxu0 0.0
    %1672 = vmatpush1.msra.mxu0 0.0
    %1673 = vmatprep.subr.mxu0 0.0
    %1674 = vmatpush1.msra.mxu0 0.0
    %1675 = vmatprep.subr.mxu0 0.0
    %1676 = vmatpush1.msra.mxu0 0.0
    %1677 = vmatprep.subr.mxu0 0.0
    %1678 = vmatpush1.msra.mxu0 0.0
    %1679 = vmatprep.subr.mxu0 0.0
    %1680 = vmatpush1.msra.mxu0 0.0
    %1681 = vmatprep.subr.mxu0 0.0
    %1682 = vmatpush1.msra.mxu0 0.0
    %1683 = vmatprep.subr.mxu0 0.0
    %1684 = vmatpush1.msra.mxu0 0.0
    %1685 = vmatprep.subr.mxu0 0.0
    %1686 = vmatpush1.msra.mxu0 0.0
    %1687 = vmatprep.subr.mxu0 0.0
    %1688 = vmatpush1.msra.mxu0 0.0
    %1689 = vmatprep.subr.mxu0 0.0
    %1690 = vmatpush1.msra.mxu0 0.0
    %1691 = vmatprep.subr.mxu0 0.0
    %1692 = vmatpush1.msra.mxu0 0.0
    %1693 = vmatprep.subr.mxu0 0.0
    %1694 = vmatpush1.msra.mxu0 0.0
    %1695 = vmatprep.subr.mxu0 0.0
    %1696 = vmatpush1.msra.mxu0 0.0
    %1697 = vmatprep.subr.mxu0 0.0
    %1698 = vmatpush1.msra.mxu0 0.0
    %1699 = vmatprep.subr.mxu0 0.0
    %1700 = vmatpush1.msra.mxu0 0.0
    %1701 = vmatprep.subr.mxu0 0.0
    %1702 = vmatpush1.msra.mxu0 0.0
    %1703 = vmatprep.subr.mxu0 0.0
    %1704 = vmatpush1.msra.mxu0 0.0
    %1705 = vmatprep.subr.mxu0 0.0
    %1706 = vmatpush1.msra.mxu0 0.0
    %1707 = vmatprep.subr.mxu0 0.0
    %1708 = vmatpush1.msra.mxu0 0.0
    %1709 = vmatprep.subr.mxu0 0.0
    %1710 = vmatpush1.msra.mxu0 0.0
    %1711 = vmatprep.subr.mxu0 0.0
    %1712 = vmatpush1.msra.mxu0 0.0
    %1713 = vmatprep.subr.mxu0 0.0
    %1714 = vmatpush1.msra.mxu0 0.0
    %1715 = vmatprep.mubr.f32.mxu0 0.0
    %1716 = vmatmul.mubr.f32.gmra.mrb[0].mxu0 %v1572
    %v1717 = vpop.f32.mrb[0].mxu0
    %v1718 = vadd.f32 0.0, %v1717
    %v1719 = vpop.f32.mrb[0].mxu0
    %1720 = vdwg.mxu0
    %v1721 = vadd.f32 %v1568, %v1718
    %v1722 = vxor.u32 %v1721, 2147483648
    %v1723 = vmul.f32 %v1722, 1.442695
    %v1724 = vpow.pop %v1723
    %v1725 = vadd.f32 %v1724, 1.0
    %v1726 = vrcp.pop %v1725
    %v1727 = vmul.f32 1.0, %v1726
    %1728 = vmatprep.subr.mxu0 0.0
    %1729 = vmatpush1.msra.mxu0 %v56
    %1730 = vmatprep.subr.mxu0 0.0
    %1731 = vmatpush1.msra.mxu0 %v57
    %1732 = vmatprep.subr.mxu0 0.0
    %1733 = vmatpush1.msra.mxu0 %v58
    %1734 = vmatprep.subr.mxu0 0.0
    %1735 = vmatpush1.msra.mxu0 %v59
    %1736 = vmatprep.subr.mxu0 0.0
    %1737 = vmatpush1.msra.mxu0 0.0
    %1738 = vmatprep.subr.mxu0 0.0
    %1739 = vmatpush1.msra.mxu0 0.0
    %1740 = vmatprep.subr.mxu0 0.0
    %1741 = vmatpush1.msra.mxu0 0.0
    %1742 = vmatprep.subr.mxu0 0.0
    %1743 = vmatpush1.msra.mxu0 0.0
    %1744 = vmatprep.subr.mxu0 0.0
    %1745 = vmatpush1.msra.mxu0 0.0
    %1746 = vmatprep.subr.mxu0 0.0
    %1747 = vmatpush1.msra.mxu0 0.0
    %1748 = vmatprep.subr.mxu0 0.0
    %1749 = vmatpush1.msra.mxu0 0.0
    %1750 = vmatprep.subr.mxu0 0.0
    %1751 = vmatpush1.msra.mxu0 0.0
    %1752 = vmatprep.subr.mxu0 0.0
    %1753 = vmatpush1.msra.mxu0 0.0
    %1754 = vmatprep.subr.mxu0 0.0
    %1755 = vmatpush1.msra.mxu0 0.0
    %1756 = vmatprep.subr.mxu0 0.0
    %1757 = vmatpush1.msra.mxu0 0.0
    %1758 = vmatprep.subr.mxu0 0.0
    %1759 = vmatpush1.msra.mxu0 0.0
    %1760 = vmatprep.subr.mxu0 0.0
    %1761 = vmatpush1.msra.mxu0 0.0
    %1762 = vmatprep.subr.mxu0 0.0
    %1763 = vmatpush1.msra.mxu0 0.0
    %1764 = vmatprep.subr.mxu0 0.0
    %1765 = vmatpush1.msra.mxu0 0.0
    %1766 = vmatprep.subr.mxu0 0.0
    %1767 = vmatpush1.msra.mxu0 0.0
    %1768 = vmatprep.subr.mxu0 0.0
    %1769 = vmatpush1.msra.mxu0 0.0
    %1770 = vmatprep.subr.mxu0 0.0
    %1771 = vmatpush1.msra.mxu0 0.0
    %1772 = vmatprep.subr.mxu0 0.0
    %1773 = vmatpush1.msra.mxu0 0.0
    %1774 = vmatprep.subr.mxu0 0.0
    %1775 = vmatpush1.msra.mxu0 0.0
    %1776 = vmatprep.subr.mxu0 0.0
    %1777 = vmatpush1.msra.mxu0 0.0
    %1778 = vmatprep.subr.mxu0 0.0
    %1779 = vmatpush1.msra.mxu0 0.0
    %1780 = vmatprep.subr.mxu0 0.0
    %1781 = vmatpush1.msra.mxu0 0.0
    %1782 = vmatprep.subr.mxu0 0.0
    %1783 = vmatpush1.msra.mxu0 0.0
    %1784 = vmatprep.subr.mxu0 0.0
    %1785 = vmatpush1.msra.mxu0 0.0
    %1786 = vmatprep.subr.mxu0 0.0
    %1787 = vmatpush1.msra.mxu0 0.0
    %1788 = vmatprep.subr.mxu0 0.0
    %1789 = vmatpush1.msra.mxu0 0.0
    %1790 = vmatprep.subr.mxu0 0.0
    %1791 = vmatpush1.msra.mxu0 0.0
    %1792 = vmatprep.mubr.f32.mxu0 0.0
    %1793 = vmatmul.mubr.f32.gmra.mrb[0].mxu0 %v1572
    %v1794 = vpop.f32.mrb[0].mxu0
    %v1795 = vadd.f32 %v228, %v1794
    %v1796 = vpop.f32.mrb[0].mxu0
    %1797 = vdwg.mxu0
    %v1798 = vmul.f32 %v1650, %v1795
    %v1799 = vadd.f32 %v1570, %v1798
    %v1800 = vtanh.pop %v1799
    %v1801 = vsub.f32 1.0, %v1727
    %v1802 = vmul.f32 %v1801, %v1800
    %v1803 = vmul.f32 %v1727, %v1564
    %v1804 = vadd.f32 %v1802, %v1803
    %s1805 = scalar_lea.vmem %s1, 48
    %v1806 = vld [vmem:[%s1805] sm:$0xff]
    %v1807 = vsub.f32 %v1804, %v1564
    %1809 = vset.pattern.permute.xlu0 0
    %1810 = vperm.xlu0 %1809, %v1806
    %v1811 = vpop.permute.xlu0 %1810
    %v1813 = vmul.f32 %v1811, %v1807
    %v1814 = vadd.f32 %v1564, %v1813
    %s1815 = scalar_lea.vmem [#allocation2], 168
    %v1816 = vld [vmem:[%s1815] sm:$0xff]
    %s1817 = scalar_lea.vmem [#allocation2], 176
    %v1818 = vld [vmem:[%s1817] sm:$0xff]
    %s1819 = scalar_lea.vmem [#allocation2], 184
    %v1820 = vld [vmem:[%s1819] sm:$0xff]
    %v1822 = vsel %vm66, %v1814, 0
    %1824 = vmatprep.subr.mxu0 0.0
    %1825 = vmatpush1.msra.mxu0 %v46
    %1826 = vmatprep.subr.mxu0 0.0
    %1827 = vmatpush1.msra.mxu0 %v47
    %1828 = vmatprep.subr.mxu0 0.0
    %1829 = vmatpush1.msra.mxu0 %v48
    %1830 = vmatprep.subr.mxu0 0.0
    %1831 = vmatpush1.msra.mxu0 %v49
    %1832 = vmatprep.subr.mxu0 0.0
    %1833 = vmatpush1.msra.mxu0 0.0
    %1834 = vmatprep.subr.mxu0 0.0
    %1835 = vmatpush1.msra.mxu0 0.0
    %1836 = vmatprep.subr.mxu0 0.0
    %1837 = vmatpush1.msra.mxu0 0.0
    %1838 = vmatprep.subr.mxu0 0.0
    %1839 = vmatpush1.msra.mxu0 0.0
    %1840 = vmatprep.subr.mxu0 0.0
    %1841 = vmatpush1.msra.mxu0 0.0
    %1842 = vmatprep.subr.mxu0 0.0
    %1843 = vmatpush1.msra.mxu0 0.0
    %1844 = vmatprep.subr.mxu0 0.0
    %1845 = vmatpush1.msra.mxu0 0.0
    %1846 = vmatprep.subr.mxu0 0.0
    %1847 = vmatpush1.msra.mxu0 0.0
    %1848 = vmatprep.subr.mxu0 0.0
    %1849 = vmatpush1.msra.mxu0 0.0
    %1850 = vmatprep.subr.mxu0 0.0
    %1851 = vmatpush1.msra.mxu0 0.0
    %1852 = vmatprep.subr.mxu0 0.0
    %1853 = vmatpush1.msra.mxu0 0.0
    %1854 = vmatprep.subr.mxu0 0.0
    %1855 = vmatpush1.msra.mxu0 0.0
    %1856 = vmatprep.subr.mxu0 0.0
    %1857 = vmatpush1.msra.mxu0 0.0
    %1858 = vmatprep.subr.mxu0 0.0
    %1859 = vmatpush1.msra.mxu0 0.0
    %1860 = vmatprep.subr.mxu0 0.0
    %1861 = vmatpush1.msra.mxu0 0.0
    %1862 = vmatprep.subr.mxu0 0.0
    %1863 = vmatpush1.msra.mxu0 0.0
    %1864 = vmatprep.subr.mxu0 0.0
    %1865 = vmatpush1.msra.mxu0 0.0
    %1866 = vmatprep.subr.mxu0 0.0
    %1867 = vmatpush1.msra.mxu0 0.0
    %1868 = vmatprep.subr.mxu0 0.0
    %1869 = vmatpush1.msra.mxu0 0.0
    %1870 = vmatprep.subr.mxu0 0.0
    %1871 = vmatpush1.msra.mxu0 0.0
    %1872 = vmatprep.subr.mxu0 0.0
    %1873 = vmatpush1.msra.mxu0 0.0
    %1874 = vmatprep.subr.mxu0 0.0
    %1875 = vmatpush1.msra.mxu0 0.0
    %1876 = vmatprep.subr.mxu0 0.0
    %1877 = vmatpush1.msra.mxu0 0.0
    %1878 = vmatprep.subr.mxu0 0.0
    %1879 = vmatpush1.msra.mxu0 0.0
    %1880 = vmatprep.subr.mxu0 0.0
    %1881 = vmatpush1.msra.mxu0 0.0
    %1882 = vmatprep.subr.mxu0 0.0
    %1883 = vmatpush1.msra.mxu0 0.0
    %1884 = vmatprep.subr.mxu0 0.0
    %1885 = vmatpush1.msra.mxu0 0.0
    %1886 = vmatprep.subr.mxu0 0.0
    %1887 = vmatpush1.msra.mxu0 0.0
    %1888 = vmatprep.mubr.f32.mxu0 0.0
    %1889 = vmatmul.mubr.f32.gmra.mrb[0].mxu0 %v1822
    %v1890 = vpop.f32.mrb[0].mxu0
    %v1891 = vadd.f32 0.0, %v1890
    %v1892 = vpop.f32.mrb[0].mxu0
    %1893 = vdwg.mxu0
    %v1894 = vadd.f32 %v1816, %v1891
    %v1895 = vxor.u32 %v1894, 2147483648
    %v1896 = vmul.f32 %v1895, 1.442695
    %v1897 = vpow.pop %v1896
    %v1898 = vadd.f32 %v1897, 1.0
    %v1899 = vrcp.pop %v1898
    %v1900 = vmul.f32 1.0, %v1899
    %1901 = vmatprep.subr.mxu0 0.0
    %1902 = vmatpush1.msra.mxu0 %v51
    %1903 = vmatprep.subr.mxu0 0.0
    %1904 = vmatpush1.msra.mxu0 %v52
    %1905 = vmatprep.subr.mxu0 0.0
    %1906 = vmatpush1.msra.mxu0 %v53
    %1907 = vmatprep.subr.mxu0 0.0
    %1908 = vmatpush1.msra.mxu0 %v54
    %1909 = vmatprep.subr.mxu0 0.0
    %1910 = vmatpush1.msra.mxu0 0.0
    %1911 = vmatprep.subr.mxu0 0.0
    %1912 = vmatpush1.msra.mxu0 0.0
    %1913 = vmatprep.subr.mxu0 0.0
    %1914 = vmatpush1.msra.mxu0 0.0
    %1915 = vmatprep.subr.mxu0 0.0
    %1916 = vmatpush1.msra.mxu0 0.0
    %1917 = vmatprep.subr.mxu0 0.0
    %1918 = vmatpush1.msra.mxu0 0.0
    %1919 = vmatprep.subr.mxu0 0.0
    %1920 = vmatpush1.msra.mxu0 0.0
    %1921 = vmatprep.subr.mxu0 0.0
    %1922 = vmatpush1.msra.mxu0 0.0
    %1923 = vmatprep.subr.mxu0 0.0
    %1924 = vmatpush1.msra.mxu0 0.0
    %1925 = vmatprep.subr.mxu0 0.0
    %1926 = vmatpush1.msra.mxu0 0.0
    %1927 = vmatprep.subr.mxu0 0.0
    %1928 = vmatpush1.msra.mxu0 0.0
    %1929 = vmatprep.subr.mxu0 0.0
    %1930 = vmatpush1.msra.mxu0 0.0
    %1931 = vmatprep.subr.mxu0 0.0
    %1932 = vmatpush1.msra.mxu0 0.0
    %1933 = vmatprep.subr.mxu0 0.0
    %1934 = vmatpush1.msra.mxu0 0.0
    %1935 = vmatprep.subr.mxu0 0.0
    %1936 = vmatpush1.msra.mxu0 0.0
    %1937 = vmatprep.subr.mxu0 0.0
    %1938 = vmatpush1.msra.mxu0 0.0
    %1939 = vmatprep.subr.mxu0 0.0
    %1940 = vmatpush1.msra.mxu0 0.0
    %1941 = vmatprep.subr.mxu0 0.0
    %1942 = vmatpush1.msra.mxu0 0.0
    %1943 = vmatprep.subr.mxu0 0.0
    %1944 = vmatpush1.msra.mxu0 0.0
    %1945 = vmatprep.subr.mxu0 0.0
    %1946 = vmatpush1.msra.mxu0 0.0
    %1947 = vmatprep.subr.mxu0 0.0
    %1948 = vmatpush1.msra.mxu0 0.0
    %1949 = vmatprep.subr.mxu0 0.0
    %1950 = vmatpush1.msra.mxu0 0.0
    %1951 = vmatprep.subr.mxu0 0.0
    %1952 = vmatpush1.msra.mxu0 0.0
    %1953 = vmatprep.subr.mxu0 0.0
    %1954 = vmatpush1.msra.mxu0 0.0
    %1955 = vmatprep.subr.mxu0 0.0
    %1956 = vmatpush1.msra.mxu0 0.0
    %1957 = vmatprep.subr.mxu0 0.0
    %1958 = vmatpush1.msra.mxu0 0.0
    %1959 = vmatprep.subr.mxu0 0.0
    %1960 = vmatpush1.msra.mxu0 0.0
    %1961 = vmatprep.subr.mxu0 0.0
    %1962 = vmatpush1.msra.mxu0 0.0
    %1963 = vmatprep.subr.mxu0 0.0
    %1964 = vmatpush1.msra.mxu0 0.0
    %1965 = vmatprep.mubr.f32.mxu0 0.0
    %1966 = vmatmul.mubr.f32.gmra.mrb[0].mxu0 %v1822
    %v1967 = vpop.f32.mrb[0].mxu0
    %v1968 = vadd.f32 0.0, %v1967
    %v1969 = vpop.f32.mrb[0].mxu0
    %1970 = vdwg.mxu0
    %v1971 = vadd.f32 %v1818, %v1968
    %v1972 = vxor.u32 %v1971, 2147483648
    %v1973 = vmul.f32 %v1972, 1.442695
    %v1974 = vpow.pop %v1973
    %v1975 = vadd.f32 %v1974, 1.0
    %v1976 = vrcp.pop %v1975
    %v1977 = vmul.f32 1.0, %v1976
    %1978 = vmatprep.subr.mxu0 0.0
    %1979 = vmatpush1.msra.mxu0 %v56
    %1980 = vmatprep.subr.mxu0 0.0
    %1981 = vmatpush1.msra.mxu0 %v57
    %1982 = vmatprep.subr.mxu0 0.0
    %1983 = vmatpush1.msra.mxu0 %v58
    %1984 = vmatprep.subr.mxu0 0.0
    %1985 = vmatpush1.msra.mxu0 %v59
    %1986 = vmatprep.subr.mxu0 0.0
    %1987 = vmatpush1.msra.mxu0 0.0
    %1988 = vmatprep.subr.mxu0 0.0
    %1989 = vmatpush1.msra.mxu0 0.0
    %1990 = vmatprep.subr.mxu0 0.0
    %1991 = vmatpush1.msra.mxu0 0.0
    %1992 = vmatprep.subr.mxu0 0.0
    %1993 = vmatpush1.msra.mxu0 0.0
    %1994 = vmatprep.subr.mxu0 0.0
    %1995 = vmatpush1.msra.mxu0 0.0
    %1996 = vmatprep.subr.mxu0 0.0
    %1997 = vmatpush1.msra.mxu0 0.0
    %1998 = vmatprep.subr.mxu0 0.0
    %1999 = vmatpush1.msra.mxu0 0.0
    %2000 = vmatprep.subr.mxu0 0.0
    %2001 = vmatpush1.msra.mxu0 0.0
    %2002 = vmatprep.subr.mxu0 0.0
    %2003 = vmatpush1.msra.mxu0 0.0
    %2004 = vmatprep.subr.mxu0 0.0
    %2005 = vmatpush1.msra.mxu0 0.0
    %2006 = vmatprep.subr.mxu0 0.0
    %2007 = vmatpush1.msra.mxu0 0.0
    %2008 = vmatprep.subr.mxu0 0.0
    %2009 = vmatpush1.msra.mxu0 0.0
    %2010 = vmatprep.subr.mxu0 0.0
    %2011 = vmatpush1.msra.mxu0 0.0
    %2012 = vmatprep.subr.mxu0 0.0
    %2013 = vmatpush1.msra.mxu0 0.0
    %2014 = vmatprep.subr.mxu0 0.0
    %2015 = vmatpush1.msra.mxu0 0.0
    %2016 = vmatprep.subr.mxu0 0.0
    %2017 = vmatpush1.msra.mxu0 0.0
    %2018 = vmatprep.subr.mxu0 0.0
    %2019 = vmatpush1.msra.mxu0 0.0
    %2020 = vmatprep.subr.mxu0 0.0
    %2021 = vmatpush1.msra.mxu0 0.0
    %2022 = vmatprep.subr.mxu0 0.0
    %2023 = vmatpush1.msra.mxu0 0.0
    %2024 = vmatprep.subr.mxu0 0.0
    %2025 = vmatpush1.msra.mxu0 0.0
    %2026 = vmatprep.subr.mxu0 0.0
    %2027 = vmatpush1.msra.mxu0 0.0
    %2028 = vmatprep.subr.mxu0 0.0
    %2029 = vmatpush1.msra.mxu0 0.0
    %2030 = vmatprep.subr.mxu0 0.0
    %2031 = vmatpush1.msra.mxu0 0.0
    %2032 = vmatprep.subr.mxu0 0.0
    %2033 = vmatpush1.msra.mxu0 0.0
    %2034 = vmatprep.subr.mxu0 0.0
    %2035 = vmatpush1.msra.mxu0 0.0
    %2036 = vmatprep.subr.mxu0 0.0
    %2037 = vmatpush1.msra.mxu0 0.0
    %2038 = vmatprep.subr.mxu0 0.0
    %2039 = vmatpush1.msra.mxu0 0.0
    %2040 = vmatprep.subr.mxu0 0.0
    %2041 = vmatpush1.msra.mxu0 0.0
    %2042 = vmatprep.mubr.f32.mxu0 0.0
    %2043 = vmatmul.mubr.f32.gmra.mrb[0].mxu0 %v1822
    %v2044 = vpop.f32.mrb[0].mxu0
    %v2045 = vadd.f32 %v228, %v2044
    %v2046 = vpop.f32.mrb[0].mxu0
    %2047 = vdwg.mxu0
    %v2048 = vmul.f32 %v1900, %v2045
    %v2049 = vadd.f32 %v1820, %v2048
    %v2050 = vtanh.pop %v2049
    %v2051 = vsub.f32 1.0, %v1977
    %v2052 = vmul.f32 %v2051, %v2050
    %v2053 = vmul.f32 %v1977, %v1814
    %v2054 = vadd.f32 %v2052, %v2053
    %s2055 = scalar_lea.vmem %s1, 56
    %v2056 = vld [vmem:[%s2055] sm:$0xff]
    %v2057 = vsub.f32 %v2054, %v1814
    %2059 = vset.pattern.permute.xlu0 0
    %2060 = vperm.xlu0 %2059, %v2056
    %v2061 = vpop.permute.xlu0 %2060
    %v2063 = vmul.f32 %v2061, %v2057
    %v2064 = vadd.f32 %v1814, %v2063
    %2065 = vst.msk [vmem:[#allocation7] sm:$0xff] %vm66, %v2064
    // Predicated region
    $region26: #{tpu_custom_call.1} parent=1 // pred_check
      _
    $region27: #{tpu_custom_call.1} parent=1 // pred_check_branch
      %2067 = sbr.rel (0) target = $region29
    $region28: #{tpu_custom_call.1} parent=1 // pred_region
      %s2069 = ssub.s32 128, 128
      %2070 = vsyncadd [#allocation4], %s2069
      %s2072 = sshll.u32 [#allocation7], 4
      %s2073 = int_to_ptr.vmem [resolvable:$true] %s2072
      %2075 = dma.vmem_to_hbm [thread:$0]  %s2073, 128, %s4, [#allocation4]
    $region29: #{tpu_custom_call.1} parent=1 // pred_fallthru
      _
    // Predicated region
    $region30: #{tpu_custom_call.1} parent=1 // pred_check
      _
    $region31: #{tpu_custom_call.1} parent=1 // pred_check_branch
      %2077 = sbr.rel (0) target = $region33
    $region32: #{tpu_custom_call.1} parent=1 // pred_region
      %2078 = dma.done [#allocation4], 128
    $region33: #{tpu_custom_call.1} parent=1 // pred_fallthru
      _
    %2079 = vsyncpa [#allocation3], 1
    %2080 = vsyncpa [#allocation6], 1
    %2081 = vsyncpa [#allocation4], 1

</llo_original>
